<compile_context>
chip_gen: v7x
topology: tpu7x:2x2x1
jax: 0.10.0
libtpu: 0.0.40
codegen_flags: <defaults>
</compile_context>

<pallas_src>
import functools

import jax
import jax.numpy as jnp
from jax.experimental import pallas as pl
from jax.experimental.pallas import tpu as pltpu

block_size = 32
dropout = 0.0          # p = 0 -> identity (no kernel work needed)
num_heads = 4
head_size = 8
d_model = num_heads * head_size   # 32


def _mha_kernel(x_ref, wqkv_ref, bqkv_ref, wp_ref, bp_ref, out_ref, *,
                n_heads, h_size):
    bb, T, C = x_ref.shape            # one batch block per grid step
    M = bb * T

    # ---- fused QKV projection: single (M, C) x (C, 128) MXU matmul ----------
    x2 = x_ref[...].astype(jnp.float32).reshape(M, C)      # merge leading dims
    qkv = jnp.dot(x2, wqkv_ref[...],
                  preferred_element_type=jnp.float32) + bqkv_ref[...]

    scale = jnp.float32(h_size ** -0.5)
    q = (qkv[:, 0 * C:1 * C] * scale).reshape(bb, T, C)    # scale folded into q once
    k = qkv[:, 1 * C:2 * C].reshape(bb, T, C)
    v = qkv[:, 2 * C:3 * C].reshape(bb, T, C)

    # ---- causal additive bias, built once for all heads ---------------------
    row = jax.lax.broadcasted_iota(jnp.int32, (T, T), 0)
    col = jax.lax.broadcasted_iota(jnp.int32, (T, T), 1)
    mask_bias = jnp.where(row >= col, 0.0, -jnp.inf).astype(jnp.float32)[None]

    # ---- attention: static per-head loop, batched over the batch block ------
    head_outs = []
    for h in range(n_heads):
        lo = h * h_size
        qh = q[:, :, lo:lo + h_size]                        # (bb, T, hs)
        kh = k[:, :, lo:lo + h_size]
        vh = v[:, :, lo:lo + h_size]
        wei = jnp.einsum('bqd,bkd->bqk', qh, kh,
                         preferred_element_type=jnp.float32) + mask_bias
        wei = wei - jnp.max(wei, axis=-1, keepdims=True)
        p = jnp.exp(wei)
        inv = pl.reciprocal(jnp.sum(p, axis=-1, keepdims=True), approx=True)
        p = p * inv                                         # softmax over keys
        head_outs.append(jnp.einsum('bqk,bkd->bqd', p, vh,
                                    preferred_element_type=jnp.float32))

    attn = jnp.concatenate(head_outs, axis=-1).reshape(M, C)   # (M, C)

    # ---- output projection: single big-M matmul -----------------------------
    y = jnp.dot(attn, wp_ref[...],
                preferred_element_type=jnp.float32) + bp_ref[...]
    # dropout p = 0.0 -> identity
    # TODO(synk): with C=32 the store is a 32-lane masked vst; a lane-dense
    # (B, T*C) output view would need a lane-widening reshape in-kernel.
    out_ref[...] = y.reshape(bb, T, C).astype(out_ref.dtype)


def _pick_batch_block(B, T, C, cap):
    # Double-buffered x + out blocks ~= 4 * (bb*T*C*4) bytes; keep well under
    # the scoped VMEM limit on every generation (v7x has only 64 MiB total).
    bytes_per_b = 4 * T * C * 4
    vmem_cap = max(1, (8 * 1024 * 1024) // bytes_per_b)
    bb = max(1, min(B, cap, vmem_cap))
    while B % bb:
        bb -= 1
    return bb


def mha_fast(x, raw_params, *, max_batch_block=512):
    """raw_params = [(wq,bq),(wk,bk),(wv,bv),(wp,bp)] in PyTorch nn.Linear
    layout: w is (out, in), b is (out,)."""
    (wq, bq), (wk, bk), (wv, bv), (wp, bp) = raw_params
    B, T, C = x.shape

    # Fuse Q/K/V weights -> (C, 3C), pad output lanes up to a multiple of 128.
    w_qkv = jnp.concatenate([wq.T, wk.T, wv.T], axis=1)
    b_qkv = jnp.concatenate([bq, bk, bv]).reshape(1, 3 * C)
    n_pad = -(-(3 * C) // 128) * 128
    if n_pad > 3 * C:
        w_qkv = jnp.pad(w_qkv, ((0, 0), (0, n_pad - 3 * C)))
        b_qkv = jnp.pad(b_qkv, ((0, 0), (0, n_pad - 3 * C)))
    wp_t = wp.T
    bp_r = bp.reshape(1, C)

    bb = _pick_batch_block(B, T, C, max_batch_block)
    grid = (B // bb,)

    kernel = functools.partial(_mha_kernel, n_heads=num_heads, h_size=head_size)
    return pl.pallas_call(
        kernel,
        out_shape=jax.ShapeDtypeStruct((B, T, C), x.dtype),
        grid=grid,
        in_specs=[pl.BlockSpec((bb, T, C), lambda i: (i, 0, 0)),
                  pl.BlockSpec((C, n_pad), lambda i: (0, 0)),
                  pl.BlockSpec((1, n_pad), lambda i: (0, 0)),
                  pl.BlockSpec((C, C), lambda i: (0, 0)),
                  pl.BlockSpec((1, C), lambda i: (0, 0))],
        out_specs=pl.BlockSpec((bb, T, C), lambda i: (i, 0, 0)),
        compiler_params=pltpu.CompilerParams(
            dimension_semantics=("parallel",)),
    )(x, w_qkv, b_qkv, wp_t, bp_r)


def _init_linear(key, fan_in, fan_out):
    # Deterministic, PyTorch-nn.Linear-style uniform(-1/sqrt(in), 1/sqrt(in)).
    kw, kb = jax.random.split(key)
    bound = 1.0 / (fan_in ** 0.5)
    w = jax.random.uniform(kw, (fan_out, fan_in), jnp.float32, -bound, bound)
    b = jax.random.uniform(kb, (fan_out,), jnp.float32, -bound, bound)
    return w, b


def _reference(x, raw_params):
    # Pure-JAX reference mirroring the PyTorch forward (for correctness check).
    (wq, bq), (wk, bk), (wv, bv), (wp, bp) = raw_params
    B, T, C = x.shape
    q = x @ wq.T + bq
    k = x @ wk.T + bk
    v = x @ wv.T + bv
    q = q.reshape(B, T, num_heads, head_size).transpose(0, 2, 1, 3)
    k = k.reshape(B, T, num_heads, head_size).transpose(0, 2, 1, 3)
    v = v.reshape(B, T, num_heads, head_size).transpose(0, 2, 1, 3)
    wei = (q @ jnp.swapaxes(k, -1, -2)) * head_size ** (-0.5)
    tril = jnp.tril(jnp.ones((T, T), dtype=bool))
    wei = jnp.where(tril, wei, -jnp.inf)
    wei = jax.nn.softmax(wei, axis=-1)
    b = wei @ v
    b = b.transpose(0, 2, 1, 3).reshape(B, T, C)
    return b @ wp.T + bp


if __name__ == "__main__":
    key = jax.random.PRNGKey(0)
    kx, kq, kk, kv, kp = jax.random.split(key, 5)

    B, T, C = 2, 8, d_model              # T <= block_size, T % 8 == 0
    x = jax.random.normal(kx, (B, T, C), jnp.float32)

    raw = [_init_linear(kq, C, C), _init_linear(kk, C, C),
           _init_linear(kv, C, C), _init_linear(kp, C, C)]

    out = mha_fast(x, raw)
    out = jax.block_until_ready(out)

    ref = _reference(x, raw)
    assert out.shape == (B, T, C)
    # Tolerance widened slightly because softmax uses the EUP approximate
    # reciprocal (pl.reciprocal(approx=True)).
    assert jnp.allclose(out, ref, atol=2e-3, rtol=2e-3), "mismatch vs reference"
    print("KERNEL_OK")
</pallas_src>

<mosaic_0001>
module attributes {stable_mosaic.version = 11 : i64} {
  func.func @_mha_kernel(%arg0: i32, %arg1: memref<2x8x32xf32, #tpu.memory_space<vmem>>, %arg2: memref<32x128xf32, #tpu.memory_space<vmem>>, %arg3: memref<1x128xf32, #tpu.memory_space<vmem>>, %arg4: memref<32x32xf32, #tpu.memory_space<vmem>>, %arg5: memref<1x32xf32, #tpu.memory_space<vmem>>, %arg6: memref<2x8x32xf32, #tpu.memory_space<vmem>>) attributes {dimension_semantics = [#tpu.dimension_semantics<parallel>], iteration_bounds = array<i64: 1>, scalar_prefetch = 0 : i64, scratch_operands = 0 : i64, tpu.core_type = #tpu.core_type<tc>, window_params = [{transform_indices = @transform_0, window_bounds = array<i64: 2, 8, 32>}, {pipeline_mode = #tpu.pipeline_mode<synchronous>, transform_indices = @transform_1, window_bounds = array<i64: 32, 128>}, {pipeline_mode = #tpu.pipeline_mode<synchronous>, transform_indices = @transform_2, window_bounds = array<i64: 1, 128>}, {pipeline_mode = #tpu.pipeline_mode<synchronous>, transform_indices = @transform_3, window_bounds = array<i64: 32, 32>}, {pipeline_mode = #tpu.pipeline_mode<synchronous>, transform_indices = @transform_4, window_bounds = array<i64: 1, 32>}, {transform_indices = @transform_5, window_bounds = array<i64: 2, 8, 32>}]} {
    %c0 = arith.constant 0 : index
    %c0_0 = arith.constant 0 : index
    %c0_1 = arith.constant 0 : index
    %0 = vector.load %arg1[%c0, %c0_0, %c0_1] : memref<2x8x32xf32, #tpu.memory_space<vmem>>, vector<2x8x32xf32>
    %1 = vector.shape_cast %0 : vector<2x8x32xf32> to vector<16x32xf32>
    %c0_2 = arith.constant 0 : index
    %c0_3 = arith.constant 0 : index
    %2 = vector.load %arg2[%c0_2, %c0_3] : memref<32x128xf32, #tpu.memory_space<vmem>>, vector<32x128xf32>
    %cst = arith.constant dense<0.000000e+00> : vector<16x128xf32>
    %3 = tpu.matmul %1, %2, %cst {dimension_numbers = #tpu.dot_dimension_numbers<[1], [0], [0], [1], [0, 0, 1, 1], [], []>} : vector<16x32xf32>, vector<32x128xf32>, vector<16x128xf32> -> vector<16x128xf32>
    %c0_4 = arith.constant 0 : index
    %c0_5 = arith.constant 0 : index
    %4 = vector.load %arg3[%c0_4, %c0_5] : memref<1x128xf32, #tpu.memory_space<vmem>>, vector<1x128xf32>
    %5 = vector.broadcast %4 : vector<1x128xf32> to vector<16x128xf32>
    %6 = arith.addf %3, %5 : vector<16x128xf32>
    %7 = vector.extract_strided_slice %6 {offsets = [0, 0], sizes = [16, 32], strides = [1, 1]} : vector<16x128xf32> to vector<16x32xf32>
    %cst_6 = arith.constant 0.353553385 : f32
    %8 = vector.broadcast %cst_6 : f32 to vector<16x32xf32>
    %9 = arith.mulf %7, %8 : vector<16x32xf32>
    %10 = vector.shape_cast %9 : vector<16x32xf32> to vector<2x8x32xf32>
    %11 = vector.extract_strided_slice %6 {offsets = [0, 32], sizes = [16, 32], strides = [1, 1]} : vector<16x128xf32> to vector<16x32xf32>
    %12 = vector.shape_cast %11 : vector<16x32xf32> to vector<2x8x32xf32>
    %13 = vector.extract_strided_slice %6 {offsets = [0, 64], sizes = [16, 32], strides = [1, 1]} : vector<16x128xf32> to vector<16x32xf32>
    %14 = vector.shape_cast %13 : vector<16x32xf32> to vector<2x8x32xf32>
    %15 = tpu.iota {dimensions = array<i32: 0>} : vector<8x8xi32>
    %16 = tpu.iota {dimensions = array<i32: 1>} : vector<8x8xi32>
    %17 = arith.cmpi sge, %15, %16 : vector<8x8xi32>
    %cst_7 = arith.constant 0.000000e+00 : f32
    %cst_8 = arith.constant 0xFF800000 : f32
    %18 = vector.broadcast %cst_7 : f32 to vector<8x8xf32>
    %19 = vector.broadcast %cst_8 : f32 to vector<8x8xf32>
    %20 = arith.select %17, %18, %19 : vector<8x8xi1>, vector<8x8xf32>
    %21 = vector.shape_cast %20 : vector<8x8xf32> to vector<1x8x8xf32>
    %22 = vector.extract_strided_slice %10 {offsets = [0, 0, 0], sizes = [2, 8, 8], strides = [1, 1, 1]} : vector<2x8x32xf32> to vector<2x8x8xf32>
    %23 = vector.extract_strided_slice %12 {offsets = [0, 0, 0], sizes = [2, 8, 8], strides = [1, 1, 1]} : vector<2x8x32xf32> to vector<2x8x8xf32>
    %24 = vector.extract_strided_slice %14 {offsets = [0, 0, 0], sizes = [2, 8, 8], strides = [1, 1, 1]} : vector<2x8x32xf32> to vector<2x8x8xf32>
    "tpu.trace_start"() <{level = 10 : i32, message = "bqd,bkd->bqk"}> : () -> ()
    %cst_9 = arith.constant dense<0.000000e+00> : vector<2x8x8xf32>
    %25 = tpu.matmul %22, %23, %cst_9 {dimension_numbers = #tpu.dot_dimension_numbers<[2], [2], [1], [1], [0, 0, 0, 1, 1, 1], [0], [0]>} : vector<2x8x8xf32>, vector<2x8x8xf32>, vector<2x8x8xf32> -> vector<2x8x8xf32>
    "tpu.trace_stop"() : () -> ()
    %26 = vector.broadcast %21 : vector<1x8x8xf32> to vector<2x8x8xf32>
    %27 = arith.addf %25, %26 : vector<2x8x8xf32>
    %cst_10 = arith.constant dense<0xFF800000> : vector<2x8xf32>
    %28 = vector.multi_reduction <maximumf>, %27, %cst_10 [2] : vector<2x8x8xf32> to vector<2x8xf32>
    %29 = vector.shape_cast %28 : vector<2x8xf32> to vector<2x8x1xf32>
    %30 = vector.broadcast %29 : vector<2x8x1xf32> to vector<2x8x8xf32>
    %31 = arith.subf %27, %30 : vector<2x8x8xf32>
    %32 = math.exp %31 : vector<2x8x8xf32>
    %cst_11 = arith.constant dense<0.000000e+00> : vector<2x8xf32>
    %33 = vector.multi_reduction <add>, %32, %cst_11 [2] : vector<2x8x8xf32> to vector<2x8xf32>
    %34 = vector.shape_cast %33 : vector<2x8xf32> to vector<2x8x1xf32>
    %35 = tpu.reciprocal %34 {approx = true} : vector<2x8x1xf32> -> vector<2x8x1xf32>
    %36 = vector.broadcast %35 : vector<2x8x1xf32> to vector<2x8x8xf32>
    %37 = arith.mulf %32, %36 : vector<2x8x8xf32>
    "tpu.trace_start"() <{level = 10 : i32, message = "bqk,bkd->bqd"}> : () -> ()
    %cst_12 = arith.constant dense<0.000000e+00> : vector<2x8x8xf32>
    %38 = tpu.matmul %37, %24, %cst_12 {dimension_numbers = #tpu.dot_dimension_numbers<[2], [1], [1], [2], [0, 0, 0, 1, 1, 2], [0], [0]>} : vector<2x8x8xf32>, vector<2x8x8xf32>, vector<2x8x8xf32> -> vector<2x8x8xf32>
    "tpu.trace_stop"() : () -> ()
    %39 = vector.extract_strided_slice %10 {offsets = [0, 0, 8], sizes = [2, 8, 8], strides = [1, 1, 1]} : vector<2x8x32xf32> to vector<2x8x8xf32>
    %40 = vector.extract_strided_slice %12 {offsets = [0, 0, 8], sizes = [2, 8, 8], strides = [1, 1, 1]} : vector<2x8x32xf32> to vector<2x8x8xf32>
    %41 = vector.extract_strided_slice %14 {offsets = [0, 0, 8], sizes = [2, 8, 8], strides = [1, 1, 1]} : vector<2x8x32xf32> to vector<2x8x8xf32>
    "tpu.trace_start"() <{level = 10 : i32, message = "bqd,bkd->bqk"}> : () -> ()
    %cst_13 = arith.constant dense<0.000000e+00> : vector<2x8x8xf32>
    %42 = tpu.matmul %39, %40, %cst_13 {dimension_numbers = #tpu.dot_dimension_numbers<[2], [2], [1], [1], [0, 0, 0, 1, 1, 1], [0], [0]>} : vector<2x8x8xf32>, vector<2x8x8xf32>, vector<2x8x8xf32> -> vector<2x8x8xf32>
    "tpu.trace_stop"() : () -> ()
    %43 = vector.broadcast %21 : vector<1x8x8xf32> to vector<2x8x8xf32>
    %44 = arith.addf %42, %43 : vector<2x8x8xf32>
    %cst_14 = arith.constant dense<0xFF800000> : vector<2x8xf32>
    %45 = vector.multi_reduction <maximumf>, %44, %cst_14 [2] : vector<2x8x8xf32> to vector<2x8xf32>
    %46 = vector.shape_cast %45 : vector<2x8xf32> to vector<2x8x1xf32>
    %47 = vector.broadcast %46 : vector<2x8x1xf32> to vector<2x8x8xf32>
    %48 = arith.subf %44, %47 : vector<2x8x8xf32>
    %49 = math.exp %48 : vector<2x8x8xf32>
    %cst_15 = arith.constant dense<0.000000e+00> : vector<2x8xf32>
    %50 = vector.multi_reduction <add>, %49, %cst_15 [2] : vector<2x8x8xf32> to vector<2x8xf32>
    %51 = vector.shape_cast %50 : vector<2x8xf32> to vector<2x8x1xf32>
    %52 = tpu.reciprocal %51 {approx = true} : vector<2x8x1xf32> -> vector<2x8x1xf32>
    %53 = vector.broadcast %52 : vector<2x8x1xf32> to vector<2x8x8xf32>
    %54 = arith.mulf %49, %53 : vector<2x8x8xf32>
    "tpu.trace_start"() <{level = 10 : i32, message = "bqk,bkd->bqd"}> : () -> ()
    %cst_16 = arith.constant dense<0.000000e+00> : vector<2x8x8xf32>
    %55 = tpu.matmul %54, %41, %cst_16 {dimension_numbers = #tpu.dot_dimension_numbers<[2], [1], [1], [2], [0, 0, 0, 1, 1, 2], [0], [0]>} : vector<2x8x8xf32>, vector<2x8x8xf32>, vector<2x8x8xf32> -> vector<2x8x8xf32>
    "tpu.trace_stop"() : () -> ()
    %56 = vector.extract_strided_slice %10 {offsets = [0, 0, 16], sizes = [2, 8, 8], strides = [1, 1, 1]} : vector<2x8x32xf32> to vector<2x8x8xf32>
    %57 = vector.extract_strided_slice %12 {offsets = [0, 0, 16], sizes = [2, 8, 8], strides = [1, 1, 1]} : vector<2x8x32xf32> to vector<2x8x8xf32>
    %58 = vector.extract_strided_slice %14 {offsets = [0, 0, 16], sizes = [2, 8, 8], strides = [1, 1, 1]} : vector<2x8x32xf32> to vector<2x8x8xf32>
    "tpu.trace_start"() <{level = 10 : i32, message = "bqd,bkd->bqk"}> : () -> ()
    %cst_17 = arith.constant dense<0.000000e+00> : vector<2x8x8xf32>
    %59 = tpu.matmul %56, %57, %cst_17 {dimension_numbers = #tpu.dot_dimension_numbers<[2], [2], [1], [1], [0, 0, 0, 1, 1, 1], [0], [0]>} : vector<2x8x8xf32>, vector<2x8x8xf32>, vector<2x8x8xf32> -> vector<2x8x8xf32>
    "tpu.trace_stop"() : () -> ()
    %60 = vector.broadcast %21 : vector<1x8x8xf32> to vector<2x8x8xf32>
    %61 = arith.addf %59, %60 : vector<2x8x8xf32>
    %cst_18 = arith.constant dense<0xFF800000> : vector<2x8xf32>
    %62 = vector.multi_reduction <maximumf>, %61, %cst_18 [2] : vector<2x8x8xf32> to vector<2x8xf32>
    %63 = vector.shape_cast %62 : vector<2x8xf32> to vector<2x8x1xf32>
    %64 = vector.broadcast %63 : vector<2x8x1xf32> to vector<2x8x8xf32>
    %65 = arith.subf %61, %64 : vector<2x8x8xf32>
    %66 = math.exp %65 : vector<2x8x8xf32>
    %cst_19 = arith.constant dense<0.000000e+00> : vector<2x8xf32>
    %67 = vector.multi_reduction <add>, %66, %cst_19 [2] : vector<2x8x8xf32> to vector<2x8xf32>
    %68 = vector.shape_cast %67 : vector<2x8xf32> to vector<2x8x1xf32>
    %69 = tpu.reciprocal %68 {approx = true} : vector<2x8x1xf32> -> vector<2x8x1xf32>
    %70 = vector.broadcast %69 : vector<2x8x1xf32> to vector<2x8x8xf32>
    %71 = arith.mulf %66, %70 : vector<2x8x8xf32>
    "tpu.trace_start"() <{level = 10 : i32, message = "bqk,bkd->bqd"}> : () -> ()
    %cst_20 = arith.constant dense<0.000000e+00> : vector<2x8x8xf32>
    %72 = tpu.matmul %71, %58, %cst_20 {dimension_numbers = #tpu.dot_dimension_numbers<[2], [1], [1], [2], [0, 0, 0, 1, 1, 2], [0], [0]>} : vector<2x8x8xf32>, vector<2x8x8xf32>, vector<2x8x8xf32> -> vector<2x8x8xf32>
    "tpu.trace_stop"() : () -> ()
    %73 = vector.extract_strided_slice %10 {offsets = [0, 0, 24], sizes = [2, 8, 8], strides = [1, 1, 1]} : vector<2x8x32xf32> to vector<2x8x8xf32>
    %74 = vector.extract_strided_slice %12 {offsets = [0, 0, 24], sizes = [2, 8, 8], strides = [1, 1, 1]} : vector<2x8x32xf32> to vector<2x8x8xf32>
    %75 = vector.extract_strided_slice %14 {offsets = [0, 0, 24], sizes = [2, 8, 8], strides = [1, 1, 1]} : vector<2x8x32xf32> to vector<2x8x8xf32>
    "tpu.trace_start"() <{level = 10 : i32, message = "bqd,bkd->bqk"}> : () -> ()
    %cst_21 = arith.constant dense<0.000000e+00> : vector<2x8x8xf32>
    %76 = tpu.matmul %73, %74, %cst_21 {dimension_numbers = #tpu.dot_dimension_numbers<[2], [2], [1], [1], [0, 0, 0, 1, 1, 1], [0], [0]>} : vector<2x8x8xf32>, vector<2x8x8xf32>, vector<2x8x8xf32> -> vector<2x8x8xf32>
    "tpu.trace_stop"() : () -> ()
    %77 = vector.broadcast %21 : vector<1x8x8xf32> to vector<2x8x8xf32>
    %78 = arith.addf %76, %77 : vector<2x8x8xf32>
    %cst_22 = arith.constant dense<0xFF800000> : vector<2x8xf32>
    %79 = vector.multi_reduction <maximumf>, %78, %cst_22 [2] : vector<2x8x8xf32> to vector<2x8xf32>
    %80 = vector.shape_cast %79 : vector<2x8xf32> to vector<2x8x1xf32>
    %81 = vector.broadcast %80 : vector<2x8x1xf32> to vector<2x8x8xf32>
    %82 = arith.subf %78, %81 : vector<2x8x8xf32>
    %83 = math.exp %82 : vector<2x8x8xf32>
    %cst_23 = arith.constant dense<0.000000e+00> : vector<2x8xf32>
    %84 = vector.multi_reduction <add>, %83, %cst_23 [2] : vector<2x8x8xf32> to vector<2x8xf32>
    %85 = vector.shape_cast %84 : vector<2x8xf32> to vector<2x8x1xf32>
    %86 = tpu.reciprocal %85 {approx = true} : vector<2x8x1xf32> -> vector<2x8x1xf32>
    %87 = vector.broadcast %86 : vector<2x8x1xf32> to vector<2x8x8xf32>
    %88 = arith.mulf %83, %87 : vector<2x8x8xf32>
    "tpu.trace_start"() <{level = 10 : i32, message = "bqk,bkd->bqd"}> : () -> ()
    %cst_24 = arith.constant dense<0.000000e+00> : vector<2x8x8xf32>
    %89 = tpu.matmul %88, %75, %cst_24 {dimension_numbers = #tpu.dot_dimension_numbers<[2], [1], [1], [2], [0, 0, 0, 1, 1, 2], [0], [0]>} : vector<2x8x8xf32>, vector<2x8x8xf32>, vector<2x8x8xf32> -> vector<2x8x8xf32>
    "tpu.trace_stop"() : () -> ()
    %90 = tpu.concatenate %38, %55, %72, %89 in 2 : vector<2x8x8xf32>, vector<2x8x8xf32>, vector<2x8x8xf32>, vector<2x8x8xf32> -> vector<2x8x32xf32>
    %91 = vector.shape_cast %90 : vector<2x8x32xf32> to vector<16x32xf32>
    %c0_25 = arith.constant 0 : index
    %c0_26 = arith.constant 0 : index
    %92 = vector.load %arg4[%c0_25, %c0_26] : memref<32x32xf32, #tpu.memory_space<vmem>>, vector<32x32xf32>
    %cst_27 = arith.constant dense<0.000000e+00> : vector<16x32xf32>
    %93 = tpu.matmul %91, %92, %cst_27 {dimension_numbers = #tpu.dot_dimension_numbers<[1], [0], [0], [1], [0, 0, 1, 1], [], []>} : vector<16x32xf32>, vector<32x32xf32>, vector<16x32xf32> -> vector<16x32xf32>
    %c0_28 = arith.constant 0 : index
    %c0_29 = arith.constant 0 : index
    %94 = vector.load %arg5[%c0_28, %c0_29] : memref<1x32xf32, #tpu.memory_space<vmem>>, vector<1x32xf32>
    %95 = vector.broadcast %94 : vector<1x32xf32> to vector<16x32xf32>
    %96 = arith.addf %93, %95 : vector<16x32xf32>
    %97 = vector.shape_cast %96 : vector<16x32xf32> to vector<2x8x32xf32>
    %c0_30 = arith.constant 0 : index
    %c0_31 = arith.constant 0 : index
    %c0_32 = arith.constant 0 : index
    %98 = vector.load %arg6[%c0_30, %c0_31, %c0_32] : memref<2x8x32xf32, #tpu.memory_space<vmem>>, vector<2x8x32xf32>
    tpu.vector_store %arg6[%c0_30, %c0_31, %c0_32], %97 {strides = array<i32>} : memref<2x8x32xf32, #tpu.memory_space<vmem>>, vector<2x8x32xf32>,
    return
  }
  func.func @transform_0(%arg0: i32) -> (i32, i32, i32) {
    %c0_i32 = arith.constant 0 : i32
    %c0_i32_0 = arith.constant 0 : i32
    %c0_i32_1 = arith.constant 0 : i32
    return %arg0, %c0_i32, %c0_i32_0 : i32, i32, i32
  }
  func.func @transform_1(%arg0: i32) -> (i32, i32) {
    %c0_i32 = arith.constant 0 : i32
    %c0_i32_0 = arith.constant 0 : i32
    %c0_i32_1 = arith.constant 0 : i32
    return %c0_i32, %c0_i32_0 : i32, i32
  }
  func.func @transform_2(%arg0: i32) -> (i32, i32) {
    %c0_i32 = arith.constant 0 : i32
    %c0_i32_0 = arith.constant 0 : i32
    %c0_i32_1 = arith.constant 0 : i32
    return %c0_i32, %c0_i32_0 : i32, i32
  }
  func.func @transform_3(%arg0: i32) -> (i32, i32) {
    %c0_i32 = arith.constant 0 : i32
    %c0_i32_0 = arith.constant 0 : i32
    %c0_i32_1 = arith.constant 0 : i32
    return %c0_i32, %c0_i32_0 : i32, i32
  }
  func.func @transform_4(%arg0: i32) -> (i32, i32) {
    %c0_i32 = arith.constant 0 : i32
    %c0_i32_0 = arith.constant 0 : i32
    %c0_i32_1 = arith.constant 0 : i32
    return %c0_i32, %c0_i32_0 : i32, i32
  }
  func.func @transform_5(%arg0: i32) -> (i32, i32, i32) {
    %c0_i32 = arith.constant 0 : i32
    %c0_i32_0 = arith.constant 0 : i32
    %c0_i32_1 = arith.constant 0 : i32
    return %arg0, %c0_i32, %c0_i32_0 : i32, i32, i32
  }
}

</mosaic_0001>

<llo_original>
// kernel: tpu_custom_call.1
$region0: #{tpu_custom_call.1}
  #allocation0 [shape = 'u32[]', space=smem, size = 0x4, offset = 0x4, fixed_abs, tag = 'smem constant byte address 0x4 - core index']
  #allocation1 [shape = 'u32[144,128]{1,0:T(1,128)}', space=vmem, size = 0x12000, scoped, tag = 'internal scratch']
  %s0 = inlined_call_operand.hbm [shape: f32[2,8,32], index: 0, kind: input, shape index: {}]
  %s1 = inlined_call_operand.hbm [shape: f32[32,128], index: 1, kind: input, shape index: {}]
  %s2 = inlined_call_operand.vmem [shape: f32[1,128], index: 2, kind: input, shape index: {}]
  %s3 = inlined_call_operand.hbm [shape: f32[32,32], index: 3, kind: input, shape index: {}]
  %s4 = inlined_call_operand.vmem [shape: f32[1,32], index: 4, kind: input, shape index: {}]
  %s5 = inlined_call_operand.hbm [shape: f32[2,8,32], index: 5, kind: output, shape index: {}]
  %s6 = sld [smem:[#allocation0]]
  $region42: #{tpu_custom_call.1} parent=0
    _
  %s8 = ssub.s32 1, %s6
  %s9 = scalar_select 0, %s8, %s6
  $region1: #{tpu_custom_call.1} parent=0
    #allocation2 [shape = 'u8[8192]{0}', space=vmem, size = 0x2000, scoped, tag = 'input window, operand 0, single buffered']
    #allocation3 [shape = 's32[1]{0}', space=sflag, size = 0x4, scoped, tag = 'scoped memory for tpu_custom_call.1']
    #allocation4 [shape = 's32[1]{0}', space=sflag, size = 0x4, scoped, tag = 'scoped memory for tpu_custom_call.1']
    #allocation5 [shape = 'u8[16384]{0}', space=vmem, size = 0x4000, scoped, tag = 'input window, operand 1, single buffered']
    #allocation6 [shape = 's32[1]{0}', space=sflag, size = 0x4, scoped, tag = 'scoped memory for tpu_custom_call.1']
    #allocation7 [shape = 'u8[16384]{0}', space=vmem, size = 0x4000, scoped, tag = 'input window, operand 3, single buffered']
    #allocation8 [shape = 'u8[8192]{0}', space=vmem, size = 0x2000, scoped, tag = 'output window, operand 0, single buffered']
    %10 = vsyncpa [#allocation3], 0
    %11 = vsyncpa [#allocation6], 0
    %12 = vsyncpa [#allocation4], 0
    // Predicated region
    $region2: #{tpu_custom_call.1} parent=1 // pred_check
      _
    $region3: #{tpu_custom_call.1} parent=1 // pred_check_branch
      %14 = sbr.rel (0) target = $region5
    $region4: #{tpu_custom_call.1} parent=1 // pred_region
      %s16 = ssub.s32 256, 256
      %17 = vsyncadd [#allocation3], %s16
      %s18 = sshll.u32 [#allocation2], 4
      %s19 = int_to_ptr.vmem [resolvable:$true] %s18
      %24 = dma.hbm_to_vmem [thread:$0]  %s0, 256, %s19, [#allocation3], 128, 128, 8
    $region5: #{tpu_custom_call.1} parent=1 // pred_fallthru
      _
    // Predicated region
    $region6: #{tpu_custom_call.1} parent=1 // pred_check
      _
    $region7: #{tpu_custom_call.1} parent=1 // pred_check_branch
      %26 = sbr.rel (0) target = $region9
    $region8: #{tpu_custom_call.1} parent=1 // pred_region
      %s28 = ssub.s32 512, 512
      %29 = vsyncadd [#allocation6], %s28
      %s30 = sshll.u32 [#allocation5], 4
      %s31 = int_to_ptr.vmem [resolvable:$true] %s30
      %36 = dma.hbm_to_vmem [thread:$0]  %s1, 512, %s31, [#allocation6], 128, 128, 8
    $region9: #{tpu_custom_call.1} parent=1 // pred_fallthru
      _
    // Predicated region
    $region10: #{tpu_custom_call.1} parent=1 // pred_check
      _
    $region11: #{tpu_custom_call.1} parent=1 // pred_check_branch
      %38 = sbr.rel (0) target = $region13
    $region12: #{tpu_custom_call.1} parent=1 // pred_region
      _
    $region13: #{tpu_custom_call.1} parent=1 // pred_fallthru
      _
    // Predicated region
    $region14: #{tpu_custom_call.1} parent=1 // pred_check
      _
    $region15: #{tpu_custom_call.1} parent=1 // pred_check_branch
      %40 = sbr.rel (0) target = $region17
    $region16: #{tpu_custom_call.1} parent=1 // pred_region
      %s42 = ssub.s32 512, 512
      %43 = vsyncadd [#allocation6], %s42
      %s44 = sshll.u32 [#allocation7], 4
      %s45 = int_to_ptr.vmem [resolvable:$true] %s44
      %50 = dma.hbm_to_vmem [thread:$0]  %s3, 512, %s45, [#allocation6], 128, 128, 8
    $region17: #{tpu_custom_call.1} parent=1 // pred_fallthru
      _
    // Predicated region
    $region18: #{tpu_custom_call.1} parent=1 // pred_check
      _
    $region19: #{tpu_custom_call.1} parent=1 // pred_check_branch
      %52 = sbr.rel (0) target = $region21
    $region20: #{tpu_custom_call.1} parent=1 // pred_region
      _
    $region21: #{tpu_custom_call.1} parent=1 // pred_fallthru
      _
    // Predicated region
    $region22: #{tpu_custom_call.1} parent=1 // pred_check
      _
    $region23: #{tpu_custom_call.1} parent=1 // pred_check_branch
      %54 = sbr.rel (0) target = $region25
    $region24: #{tpu_custom_call.1} parent=1 // pred_region
      %55 = dma.done [#allocation3], 256
    $region25: #{tpu_custom_call.1} parent=1 // pred_fallthru
      _
    // Predicated region
    $region26: #{tpu_custom_call.1} parent=1 // pred_check
      _
    $region27: #{tpu_custom_call.1} parent=1 // pred_check_branch
      %57 = sbr.rel (0) target = $region29
    $region28: #{tpu_custom_call.1} parent=1 // pred_region
      %58 = dma.done [#allocation6], 512
    $region29: #{tpu_custom_call.1} parent=1 // pred_fallthru
      _
    // Predicated region
    $region30: #{tpu_custom_call.1} parent=1 // pred_check
      _
    $region31: #{tpu_custom_call.1} parent=1 // pred_check_branch
      %60 = sbr.rel (0) target = $region33
    $region32: #{tpu_custom_call.1} parent=1 // pred_region
      %61 = dma.done [#allocation6], 512
    $region33: #{tpu_custom_call.1} parent=1 // pred_fallthru
      _
    %v62 = vld [vmem:[#allocation2] sm:$0xff]
    %v63 = vld [vmem:[#allocation2 + $0x8] sm:$0xff]
    %v64 = vld [vmem:[#allocation5] sm:$0xff]
    %v65 = vld [vmem:[#allocation5 + $0x8] sm:$0xff]
    %v66 = vld [vmem:[#allocation5 + $0x10] sm:$0xff]
    %v67 = vld [vmem:[#allocation5 + $0x18] sm:$0xff]
    %v68 = vld [vmem:[%s2] sm:$0x1]
    %v70 = vlaneseq
    %v71 = vshrl.u32 %v70, 7
    %v72 = vsub.s32 0, %v71
    %v73 = vrot.slane %v68, %v72
    %vm75 = vcmask 261120
    %v77 = vsel %vm75, %v62, 0
    %v80 = vsel %vm75, %v63, 0
    %82 = vmatprep.subr.mxu0 0.0
    %83 = vmatpush1.msra.mxu0 %v64
    %84 = vmatprep.subr.mxu0 0.0
    %85 = vmatpush1.msra.mxu0 %v65
    %86 = vmatprep.subr.mxu0 0.0
    %87 = vmatpush1.msra.mxu0 %v66
    %88 = vmatprep.subr.mxu0 0.0
    %89 = vmatpush1.msra.mxu0 %v67
    %90 = vmatprep.subr.mxu0 0.0
    %91 = vmatpush1.msra.mxu0 0.0
    %92 = vmatprep.subr.mxu0 0.0
    %93 = vmatpush1.msra.mxu0 0.0
    %94 = vmatprep.subr.mxu0 0.0
    %95 = vmatpush1.msra.mxu0 0.0
    %96 = vmatprep.subr.mxu0 0.0
    %97 = vmatpush1.msra.mxu0 0.0
    %98 = vmatprep.subr.mxu0 0.0
    %99 = vmatpush1.msra.mxu0 0.0
    %100 = vmatprep.subr.mxu0 0.0
    %101 = vmatpush1.msra.mxu0 0.0
    %102 = vmatprep.subr.mxu0 0.0
    %103 = vmatpush1.msra.mxu0 0.0
    %104 = vmatprep.subr.mxu0 0.0
    %105 = vmatpush1.msra.mxu0 0.0
    %106 = vmatprep.subr.mxu0 0.0
    %107 = vmatpush1.msra.mxu0 0.0
    %108 = vmatprep.subr.mxu0 0.0
    %109 = vmatpush1.msra.mxu0 0.0
    %110 = vmatprep.subr.mxu0 0.0
    %111 = vmatpush1.msra.mxu0 0.0
    %112 = vmatprep.subr.mxu0 0.0
    %113 = vmatpush1.msra.mxu0 0.0
    %114 = vmatprep.subr.mxu0 0.0
    %115 = vmatpush1.msra.mxu0 0.0
    %116 = vmatprep.subr.mxu0 0.0
    %117 = vmatpush1.msra.mxu0 0.0
    %118 = vmatprep.subr.mxu0 0.0
    %119 = vmatpush1.msra.mxu0 0.0
    %120 = vmatprep.subr.mxu0 0.0
    %121 = vmatpush1.msra.mxu0 0.0
    %122 = vmatprep.subr.mxu0 0.0
    %123 = vmatpush1.msra.mxu0 0.0
    %124 = vmatprep.subr.mxu0 0.0
    %125 = vmatpush1.msra.mxu0 0.0
    %126 = vmatprep.subr.mxu0 0.0
    %127 = vmatpush1.msra.mxu0 0.0
    %128 = vmatprep.subr.mxu0 0.0
    %129 = vmatpush1.msra.mxu0 0.0
    %130 = vmatprep.subr.mxu0 0.0
    %131 = vmatpush1.msra.mxu0 0.0
    %132 = vmatprep.subr.mxu0 0.0
    %133 = vmatpush1.msra.mxu0 0.0
    %134 = vmatprep.subr.mxu0 0.0
    %135 = vmatpush1.msra.mxu0 0.0
    %136 = vmatprep.subr.mxu0 0.0
    %137 = vmatpush1.msra.mxu0 0.0
    %138 = vmatprep.subr.mxu0 0.0
    %139 = vmatpush1.msra.mxu0 0.0
    %140 = vmatprep.subr.mxu0 0.0
    %141 = vmatpush1.msra.mxu0 0.0
    %142 = vmatprep.subr.mxu0 0.0
    %143 = vmatpush1.msra.mxu0 0.0
    %144 = vmatprep.subr.mxu0 0.0
    %145 = vmatpush1.msra.mxu0 0.0
    %146 = vmatprep.mubr.f32.mxu0 0.0
    %147 = vmatmul.mubr.f32.gmra.mrb[0].mxu0 %v77
    %v148 = vpop.f32.mrb[0].mxu0
    %v149 = vadd.f32 %v73, %v148
    %v150 = vpop.f32.mrb[0].mxu0
    %151 = vmatprep.mubr.f32.mxu0 0.0
    %152 = vmatmul.mubr.f32.gmra.mrb[0].mxu0 %v80
    %v153 = vpop.f32.mrb[0].mxu0
    %v154 = vadd.f32 %v73, %v153
    %v155 = vpop.f32.mrb[0].mxu0
    %156 = vdwg.mxu0
    %v157 = vmul.f32 %v149, 0.35355338
    %v158 = vmul.f32 %v154, 0.35355338
    %v159 = vlaneseq
    %v160 = vshrl.u32 %v159, 7
    %v161 = vlaneseq
    %v162 = vand.u32 %v161, 127
    %vm163 = vcmp.ge.s32.totalorder %v160, %v162
    %v164 = vsel %vm163, 0.0, -inf
    %166 = vrot.lane.b32.xlu0 %v149, 96
    %v167 = vpop.permute.xlu0 %166
    %vm168 = vcmask 64512
    %v170 = vsel %vm168, %v157, 0
    %v172 = vsel %vm168, %v167, 0
    %174 = vmatprep.subr.mxu0 0.0
    %175 = vmatpush1.xpose.msra.mxu0 %v172
    %176 = vmatprep.subr.mxu0 0.0
    %177 = vmatpush1.xpose.msra.mxu0 0.0
    %178 = vmatprep.subr.mxu0 0.0
    %179 = vmatpush1.xpose.msra.mxu0 0.0
    %180 = vmatprep.subr.mxu0 0.0
    %181 = vmatpush1.xpose.msra.mxu0 0.0
    %182 = vmatprep.subr.mxu0 0.0
    %183 = vmatpush1.xpose.msra.mxu0 0.0
    %184 = vmatprep.subr.mxu0 0.0
    %185 = vmatpush1.xpose.msra.mxu0 0.0
    %186 = vmatprep.subr.mxu0 0.0
    %187 = vmatpush1.xpose.msra.mxu0 0.0
    %188 = vmatprep.subr.mxu0 0.0
    %189 = vmatpush1.xpose.msra.mxu0 0.0
    %190 = vmatprep.subr.mxu0 0.0
    %191 = vmatpush1.xpose.msra.mxu0 0.0
    %192 = vmatprep.subr.mxu0 0.0
    %193 = vmatpush1.xpose.msra.mxu0 0.0
    %194 = vmatprep.subr.mxu0 0.0
    %195 = vmatpush1.xpose.msra.mxu0 0.0
    %196 = vmatprep.subr.mxu0 0.0
    %197 = vmatpush1.xpose.msra.mxu0 0.0
    %198 = vmatprep.subr.mxu0 0.0
    %199 = vmatpush1.xpose.msra.mxu0 0.0
    %200 = vmatprep.subr.mxu0 0.0
    %201 = vmatpush1.xpose.msra.mxu0 0.0
    %202 = vmatprep.subr.mxu0 0.0
    %203 = vmatpush1.xpose.msra.mxu0 0.0
    %204 = vmatprep.subr.mxu0 0.0
    %205 = vmatpush1.xpose.msra.mxu0 0.0
    %206 = vmatprep.subr.mxu0 0.0
    %207 = vmatpush1.xpose.msra.mxu0 0.0
    %208 = vmatprep.subr.mxu0 0.0
    %209 = vmatpush1.xpose.msra.mxu0 0.0
    %210 = vmatprep.subr.mxu0 0.0
    %211 = vmatpush1.xpose.msra.mxu0 0.0
    %212 = vmatprep.subr.mxu0 0.0
    %213 = vmatpush1.xpose.msra.mxu0 0.0
    %214 = vmatprep.subr.mxu0 0.0
    %215 = vmatpush1.xpose.msra.mxu0 0.0
    %216 = vmatprep.subr.mxu0 0.0
    %217 = vmatpush1.xpose.msra.mxu0 0.0
    %218 = vmatprep.subr.mxu0 0.0
    %219 = vmatpush1.xpose.msra.mxu0 0.0
    %220 = vmatprep.subr.mxu0 0.0
    %221 = vmatpush1.xpose.msra.mxu0 0.0
    %222 = vmatprep.subr.mxu0 0.0
    %223 = vmatpush1.xpose.msra.mxu0 0.0
    %224 = vmatprep.subr.mxu0 0.0
    %225 = vmatpush1.xpose.msra.mxu0 0.0
    %226 = vmatprep.subr.mxu0 0.0
    %227 = vmatpush1.xpose.msra.mxu0 0.0
    %228 = vmatprep.subr.mxu0 0.0
    %229 = vmatpush1.xpose.msra.mxu0 0.0
    %230 = vmatprep.subr.mxu0 0.0
    %231 = vmatpush1.xpose.msra.mxu0 0.0
    %232 = vmatprep.subr.mxu0 0.0
    %233 = vmatpush1.xpose.msra.mxu0 0.0
    %234 = vmatprep.subr.mxu0 0.0
    %235 = vmatpush1.xpose.msra.mxu0 0.0
    %236 = vmatprep.subr.mxu0 0.0
    %237 = vmatpush1.xpose.msra.mxu0 0.0
    %238 = vmatprep.mubr.f32.mxu0 0.0
    %239 = vmatmul.mubr.f32.gmra.mrb[0].mxu0 %v170
    %v240 = vpop.f32.mrb[0].mxu0
    %v241 = vadd.f32 %v164, %v240
    %v242 = vpop.f32.mrb[0].mxu0
    %243 = vdwg.mxu0
    %245 = vrot.lane.b32.xlu0 %v154, 96
    %v246 = vpop.permute.xlu0 %245
    %v248 = vsel %vm168, %v158, 0
    %v250 = vsel %vm168, %v246, 0
    %252 = vmatprep.subr.mxu0 0.0
    %253 = vmatpush1.xpose.msra.mxu0 %v250
    %254 = vmatprep.subr.mxu0 0.0
    %255 = vmatpush1.xpose.msra.mxu0 0.0
    %256 = vmatprep.subr.mxu0 0.0
    %257 = vmatpush1.xpose.msra.mxu0 0.0
    %258 = vmatprep.subr.mxu0 0.0
    %259 = vmatpush1.xpose.msra.mxu0 0.0
    %260 = vmatprep.subr.mxu0 0.0
    %261 = vmatpush1.xpose.msra.mxu0 0.0
    %262 = vmatprep.subr.mxu0 0.0
    %263 = vmatpush1.xpose.msra.mxu0 0.0
    %264 = vmatprep.subr.mxu0 0.0
    %265 = vmatpush1.xpose.msra.mxu0 0.0
    %266 = vmatprep.subr.mxu0 0.0
    %267 = vmatpush1.xpose.msra.mxu0 0.0
    %268 = vmatprep.subr.mxu0 0.0
    %269 = vmatpush1.xpose.msra.mxu0 0.0
    %270 = vmatprep.subr.mxu0 0.0
    %271 = vmatpush1.xpose.msra.mxu0 0.0
    %272 = vmatprep.subr.mxu0 0.0
    %273 = vmatpush1.xpose.msra.mxu0 0.0
    %274 = vmatprep.subr.mxu0 0.0
    %275 = vmatpush1.xpose.msra.mxu0 0.0
    %276 = vmatprep.subr.mxu0 0.0
    %277 = vmatpush1.xpose.msra.mxu0 0.0
    %278 = vmatprep.subr.mxu0 0.0
    %279 = vmatpush1.xpose.msra.mxu0 0.0
    %280 = vmatprep.subr.mxu0 0.0
    %281 = vmatpush1.xpose.msra.mxu0 0.0
    %282 = vmatprep.subr.mxu0 0.0
    %283 = vmatpush1.xpose.msra.mxu0 0.0
    %284 = vmatprep.subr.mxu0 0.0
    %285 = vmatpush1.xpose.msra.mxu0 0.0
    %286 = vmatprep.subr.mxu0 0.0
    %287 = vmatpush1.xpose.msra.mxu0 0.0
    %288 = vmatprep.subr.mxu0 0.0
    %289 = vmatpush1.xpose.msra.mxu0 0.0
    %290 = vmatprep.subr.mxu0 0.0
    %291 = vmatpush1.xpose.msra.mxu0 0.0
    %292 = vmatprep.subr.mxu0 0.0
    %293 = vmatpush1.xpose.msra.mxu0 0.0
    %294 = vmatprep.subr.mxu0 0.0
    %295 = vmatpush1.xpose.msra.mxu0 0.0
    %296 = vmatprep.subr.mxu0 0.0
    %297 = vmatpush1.xpose.msra.mxu0 0.0
    %298 = vmatprep.subr.mxu0 0.0
    %299 = vmatpush1.xpose.msra.mxu0 0.0
    %300 = vmatprep.subr.mxu0 0.0
    %301 = vmatpush1.xpose.msra.mxu0 0.0
    %302 = vmatprep.subr.mxu0 0.0
    %303 = vmatpush1.xpose.msra.mxu0 0.0
    %304 = vmatprep.subr.mxu0 0.0
    %305 = vmatpush1.xpose.msra.mxu0 0.0
    %306 = vmatprep.subr.mxu0 0.0
    %307 = vmatpush1.xpose.msra.mxu0 0.0
    %308 = vmatprep.subr.mxu0 0.0
    %309 = vmatpush1.xpose.msra.mxu0 0.0
    %310 = vmatprep.subr.mxu0 0.0
    %311 = vmatpush1.xpose.msra.mxu0 0.0
    %312 = vmatprep.subr.mxu0 0.0
    %313 = vmatpush1.xpose.msra.mxu0 0.0
    %314 = vmatprep.subr.mxu0 0.0
    %315 = vmatpush1.xpose.msra.mxu0 0.0
    %316 = vmatprep.mubr.f32.mxu0 0.0
    %317 = vmatmul.mubr.f32.gmra.mrb[0].mxu0 %v248
    %v318 = vpop.f32.mrb[0].mxu0
    %v319 = vadd.f32 %v164, %v318
    %v320 = vpop.f32.mrb[0].mxu0
    %321 = vdwg.mxu0
    %v322 = vsel %vm168, %v241, -inf
    %323 = vmax.xlane.f32.xlu0 %v322
    %v324 = vpop.xlane.xlu0 %323
    %v325 = vsel %vm168, %v319, -inf
    %326 = vmax.xlane.f32.xlu0 %v325
    %v327 = vpop.xlane.xlu0 %326
    %v328 = vsub.f32 %v241, %v324
    %v329 = vsub.f32 %v319, %v327
    %v330 = vmul.f32 %v328, 1.442695
    %v331 = vpow.pop %v330
    %v332 = vmul.f32 %v329, 1.442695
    %v333 = vpow.pop %v332
    %v334 = vsel %vm168, %v331, 0.0
    %335 = vadd.xlane.f32.xlu0 %v334
    %v336 = vpop.xlane.xlu0 %335
    %v337 = vsel %vm168, %v333, 0.0
    %338 = vadd.xlane.f32.xlu0 %v337
    %v339 = vpop.xlane.xlu0 %338
    %v340 = vrcp.pop %v336
    %v341 = vrcp.pop %v339
    %v342 = vmul.f32 %v331, %v340
    %v343 = vmul.f32 %v333, %v341
    %344 = vrot.lane.b32.xlu0 %v149, 64
    %v345 = vpop.permute.xlu0 %344
    %v348 = vsel %vm168, %v342, 0
    %350 = vmatprep.subr.mxu0 0.0
    %351 = vmatpush1.msra.mxu0 %v345
    %352 = vmatprep.subr.mxu0 0.0
    %353 = vmatpush1.msra.mxu0 0.0
    %354 = vmatprep.subr.mxu0 0.0
    %355 = vmatpush1.msra.mxu0 0.0
    %356 = vmatprep.subr.mxu0 0.0
    %357 = vmatpush1.msra.mxu0 0.0
    %358 = vmatprep.subr.mxu0 0.0
    %359 = vmatpush1.msra.mxu0 0.0
    %360 = vmatprep.subr.mxu0 0.0
    %361 = vmatpush1.msra.mxu0 0.0
    %362 = vmatprep.subr.mxu0 0.0
    %363 = vmatpush1.msra.mxu0 0.0
    %364 = vmatprep.subr.mxu0 0.0
    %365 = vmatpush1.msra.mxu0 0.0
    %366 = vmatprep.subr.mxu0 0.0
    %367 = vmatpush1.msra.mxu0 0.0
    %368 = vmatprep.subr.mxu0 0.0
    %369 = vmatpush1.msra.mxu0 0.0
    %370 = vmatprep.subr.mxu0 0.0
    %371 = vmatpush1.msra.mxu0 0.0
    %372 = vmatprep.subr.mxu0 0.0
    %373 = vmatpush1.msra.mxu0 0.0
    %374 = vmatprep.subr.mxu0 0.0
    %375 = vmatpush1.msra.mxu0 0.0
    %376 = vmatprep.subr.mxu0 0.0
    %377 = vmatpush1.msra.mxu0 0.0
    %378 = vmatprep.subr.mxu0 0.0
    %379 = vmatpush1.msra.mxu0 0.0
    %380 = vmatprep.subr.mxu0 0.0
    %381 = vmatpush1.msra.mxu0 0.0
    %382 = vmatprep.subr.mxu0 0.0
    %383 = vmatpush1.msra.mxu0 0.0
    %384 = vmatprep.subr.mxu0 0.0
    %385 = vmatpush1.msra.mxu0 0.0
    %386 = vmatprep.subr.mxu0 0.0
    %387 = vmatpush1.msra.mxu0 0.0
    %388 = vmatprep.subr.mxu0 0.0
    %389 = vmatpush1.msra.mxu0 0.0
    %390 = vmatprep.subr.mxu0 0.0
    %391 = vmatpush1.msra.mxu0 0.0
    %392 = vmatprep.subr.mxu0 0.0
    %393 = vmatpush1.msra.mxu0 0.0
    %394 = vmatprep.subr.mxu0 0.0
    %395 = vmatpush1.msra.mxu0 0.0
    %396 = vmatprep.subr.mxu0 0.0
    %397 = vmatpush1.msra.mxu0 0.0
    %398 = vmatprep.subr.mxu0 0.0
    %399 = vmatpush1.msra.mxu0 0.0
    %400 = vmatprep.subr.mxu0 0.0
    %401 = vmatpush1.msra.mxu0 0.0
    %402 = vmatprep.subr.mxu0 0.0
    %403 = vmatpush1.msra.mxu0 0.0
    %404 = vmatprep.subr.mxu0 0.0
    %405 = vmatpush1.msra.mxu0 0.0
    %406 = vmatprep.subr.mxu0 0.0
    %407 = vmatpush1.msra.mxu0 0.0
    %408 = vmatprep.subr.mxu0 0.0
    %409 = vmatpush1.msra.mxu0 0.0
    %410 = vmatprep.subr.mxu0 0.0
    %411 = vmatpush1.msra.mxu0 0.0
    %412 = vmatprep.subr.mxu0 0.0
    %413 = vmatpush1.msra.mxu0 0.0
    %414 = vmatprep.mubr.f32.mxu0 0.0
    %415 = vmatmul.mubr.f32.gmra.mrb[0].mxu0 %v348
    %v416 = vpop.f32.mrb[0].mxu0
    %v417 = vadd.f32 0.0, %v416
    %v418 = vpop.f32.mrb[0].mxu0
    %419 = vdwg.mxu0
    %420 = vrot.lane.b32.xlu0 %v154, 64
    %v421 = vpop.permute.xlu0 %420
    %v424 = vsel %vm168, %v343, 0
    %426 = vmatprep.subr.mxu0 0.0
    %427 = vmatpush1.msra.mxu0 %v421
    %428 = vmatprep.subr.mxu0 0.0
    %429 = vmatpush1.msra.mxu0 0.0
    %430 = vmatprep.subr.mxu0 0.0
    %431 = vmatpush1.msra.mxu0 0.0
    %432 = vmatprep.subr.mxu0 0.0
    %433 = vmatpush1.msra.mxu0 0.0
    %434 = vmatprep.subr.mxu0 0.0
    %435 = vmatpush1.msra.mxu0 0.0
    %436 = vmatprep.subr.mxu0 0.0
    %437 = vmatpush1.msra.mxu0 0.0
    %438 = vmatprep.subr.mxu0 0.0
    %439 = vmatpush1.msra.mxu0 0.0
    %440 = vmatprep.subr.mxu0 0.0
    %441 = vmatpush1.msra.mxu0 0.0
    %442 = vmatprep.subr.mxu0 0.0
    %443 = vmatpush1.msra.mxu0 0.0
    %444 = vmatprep.subr.mxu0 0.0
    %445 = vmatpush1.msra.mxu0 0.0
    %446 = vmatprep.subr.mxu0 0.0
    %447 = vmatpush1.msra.mxu0 0.0
    %448 = vmatprep.subr.mxu0 0.0
    %449 = vmatpush1.msra.mxu0 0.0
    %450 = vmatprep.subr.mxu0 0.0
    %451 = vmatpush1.msra.mxu0 0.0
    %452 = vmatprep.subr.mxu0 0.0
    %453 = vmatpush1.msra.mxu0 0.0
    %454 = vmatprep.subr.mxu0 0.0
    %455 = vmatpush1.msra.mxu0 0.0
    %456 = vmatprep.subr.mxu0 0.0
    %457 = vmatpush1.msra.mxu0 0.0
    %458 = vmatprep.subr.mxu0 0.0
    %459 = vmatpush1.msra.mxu0 0.0
    %460 = vmatprep.subr.mxu0 0.0
    %461 = vmatpush1.msra.mxu0 0.0
    %462 = vmatprep.subr.mxu0 0.0
    %463 = vmatpush1.msra.mxu0 0.0
    %464 = vmatprep.subr.mxu0 0.0
    %465 = vmatpush1.msra.mxu0 0.0
    %466 = vmatprep.subr.mxu0 0.0
    %467 = vmatpush1.msra.mxu0 0.0
    %468 = vmatprep.subr.mxu0 0.0
    %469 = vmatpush1.msra.mxu0 0.0
    %470 = vmatprep.subr.mxu0 0.0
    %471 = vmatpush1.msra.mxu0 0.0
    %472 = vmatprep.subr.mxu0 0.0
    %473 = vmatpush1.msra.mxu0 0.0
    %474 = vmatprep.subr.mxu0 0.0
    %475 = vmatpush1.msra.mxu0 0.0
    %476 = vmatprep.subr.mxu0 0.0
    %477 = vmatpush1.msra.mxu0 0.0
    %478 = vmatprep.subr.mxu0 0.0
    %479 = vmatpush1.msra.mxu0 0.0
    %480 = vmatprep.subr.mxu0 0.0
    %481 = vmatpush1.msra.mxu0 0.0
    %482 = vmatprep.subr.mxu0 0.0
    %483 = vmatpush1.msra.mxu0 0.0
    %484 = vmatprep.subr.mxu0 0.0
    %485 = vmatpush1.msra.mxu0 0.0
    %486 = vmatprep.subr.mxu0 0.0
    %487 = vmatpush1.msra.mxu0 0.0
    %488 = vmatprep.subr.mxu0 0.0
    %489 = vmatpush1.msra.mxu0 0.0
    %490 = vmatprep.mubr.f32.mxu0 0.0
    %491 = vmatmul.mubr.f32.gmra.mrb[0].mxu0 %v424
    %v492 = vpop.f32.mrb[0].mxu0
    %v493 = vadd.f32 0.0, %v492
    %v494 = vpop.f32.mrb[0].mxu0
    %495 = vdwg.mxu0
    %496 = vrot.lane.b32.xlu0 %v157, 120
    %v497 = vpop.permute.xlu0 %496
    %498 = vrot.lane.b32.xlu0 %v149, 88
    %v499 = vpop.permute.xlu0 %498
    %v500 = vsel %vm168, %v497, 0
    %v502 = vsel %vm168, %v499, 0
    %504 = vmatprep.subr.mxu0 0.0
    %505 = vmatpush1.xpose.msra.mxu0 %v502
    %506 = vmatprep.subr.mxu0 0.0
    %507 = vmatpush1.xpose.msra.mxu0 0.0
    %508 = vmatprep.subr.mxu0 0.0
    %509 = vmatpush1.xpose.msra.mxu0 0.0
    %510 = vmatprep.subr.mxu0 0.0
    %511 = vmatpush1.xpose.msra.mxu0 0.0
    %512 = vmatprep.subr.mxu0 0.0
    %513 = vmatpush1.xpose.msra.mxu0 0.0
    %514 = vmatprep.subr.mxu0 0.0
    %515 = vmatpush1.xpose.msra.mxu0 0.0
    %516 = vmatprep.subr.mxu0 0.0
    %517 = vmatpush1.xpose.msra.mxu0 0.0
    %518 = vmatprep.subr.mxu0 0.0
    %519 = vmatpush1.xpose.msra.mxu0 0.0
    %520 = vmatprep.subr.mxu0 0.0
    %521 = vmatpush1.xpose.msra.mxu0 0.0
    %522 = vmatprep.subr.mxu0 0.0
    %523 = vmatpush1.xpose.msra.mxu0 0.0
    %524 = vmatprep.subr.mxu0 0.0
    %525 = vmatpush1.xpose.msra.mxu0 0.0
    %526 = vmatprep.subr.mxu0 0.0
    %527 = vmatpush1.xpose.msra.mxu0 0.0
    %528 = vmatprep.subr.mxu0 0.0
    %529 = vmatpush1.xpose.msra.mxu0 0.0
    %530 = vmatprep.subr.mxu0 0.0
    %531 = vmatpush1.xpose.msra.mxu0 0.0
    %532 = vmatprep.subr.mxu0 0.0
    %533 = vmatpush1.xpose.msra.mxu0 0.0
    %534 = vmatprep.subr.mxu0 0.0
    %535 = vmatpush1.xpose.msra.mxu0 0.0
    %536 = vmatprep.subr.mxu0 0.0
    %537 = vmatpush1.xpose.msra.mxu0 0.0
    %538 = vmatprep.subr.mxu0 0.0
    %539 = vmatpush1.xpose.msra.mxu0 0.0
    %540 = vmatprep.subr.mxu0 0.0
    %541 = vmatpush1.xpose.msra.mxu0 0.0
    %542 = vmatprep.subr.mxu0 0.0
    %543 = vmatpush1.xpose.msra.mxu0 0.0
    %544 = vmatprep.subr.mxu0 0.0
    %545 = vmatpush1.xpose.msra.mxu0 0.0
    %546 = vmatprep.subr.mxu0 0.0
    %547 = vmatpush1.xpose.msra.mxu0 0.0
    %548 = vmatprep.subr.mxu0 0.0
    %549 = vmatpush1.xpose.msra.mxu0 0.0
    %550 = vmatprep.subr.mxu0 0.0
    %551 = vmatpush1.xpose.msra.mxu0 0.0
    %552 = vmatprep.subr.mxu0 0.0
    %553 = vmatpush1.xpose.msra.mxu0 0.0
    %554 = vmatprep.subr.mxu0 0.0
    %555 = vmatpush1.xpose.msra.mxu0 0.0
    %556 = vmatprep.subr.mxu0 0.0
    %557 = vmatpush1.xpose.msra.mxu0 0.0
    %558 = vmatprep.subr.mxu0 0.0
    %559 = vmatpush1.xpose.msra.mxu0 0.0
    %560 = vmatprep.subr.mxu0 0.0
    %561 = vmatpush1.xpose.msra.mxu0 0.0
    %562 = vmatprep.subr.mxu0 0.0
    %563 = vmatpush1.xpose.msra.mxu0 0.0
    %564 = vmatprep.subr.mxu0 0.0
    %565 = vmatpush1.xpose.msra.mxu0 0.0
    %566 = vmatprep.subr.mxu0 0.0
    %567 = vmatpush1.xpose.msra.mxu0 0.0
    %568 = vmatprep.mubr.f32.mxu0 0.0
    %569 = vmatmul.mubr.f32.gmra.mrb[0].mxu0 %v500
    %v570 = vpop.f32.mrb[0].mxu0
    %v571 = vadd.f32 %v164, %v570
    %v572 = vpop.f32.mrb[0].mxu0
    %573 = vdwg.mxu0
    %574 = vrot.lane.b32.xlu0 %v158, 120
    %v575 = vpop.permute.xlu0 %574
    %576 = vrot.lane.b32.xlu0 %v154, 88
    %v577 = vpop.permute.xlu0 %576
    %v578 = vsel %vm168, %v575, 0
    %v580 = vsel %vm168, %v577, 0
    %582 = vmatprep.subr.mxu0 0.0
    %583 = vmatpush1.xpose.msra.mxu0 %v580
    %584 = vmatprep.subr.mxu0 0.0
    %585 = vmatpush1.xpose.msra.mxu0 0.0
    %586 = vmatprep.subr.mxu0 0.0
    %587 = vmatpush1.xpose.msra.mxu0 0.0
    %588 = vmatprep.subr.mxu0 0.0
    %589 = vmatpush1.xpose.msra.mxu0 0.0
    %590 = vmatprep.subr.mxu0 0.0
    %591 = vmatpush1.xpose.msra.mxu0 0.0
    %592 = vmatprep.subr.mxu0 0.0
    %593 = vmatpush1.xpose.msra.mxu0 0.0
    %594 = vmatprep.subr.mxu0 0.0
    %595 = vmatpush1.xpose.msra.mxu0 0.0
    %596 = vmatprep.subr.mxu0 0.0
    %597 = vmatpush1.xpose.msra.mxu0 0.0
    %598 = vmatprep.subr.mxu0 0.0
    %599 = vmatpush1.xpose.msra.mxu0 0.0
    %600 = vmatprep.subr.mxu0 0.0
    %601 = vmatpush1.xpose.msra.mxu0 0.0
    %602 = vmatprep.subr.mxu0 0.0
    %603 = vmatpush1.xpose.msra.mxu0 0.0
    %604 = vmatprep.subr.mxu0 0.0
    %605 = vmatpush1.xpose.msra.mxu0 0.0
    %606 = vmatprep.subr.mxu0 0.0
    %607 = vmatpush1.xpose.msra.mxu0 0.0
    %608 = vmatprep.subr.mxu0 0.0
    %609 = vmatpush1.xpose.msra.mxu0 0.0
    %610 = vmatprep.subr.mxu0 0.0
    %611 = vmatpush1.xpose.msra.mxu0 0.0
    %612 = vmatprep.subr.mxu0 0.0
    %613 = vmatpush1.xpose.msra.mxu0 0.0
    %614 = vmatprep.subr.mxu0 0.0
    %615 = vmatpush1.xpose.msra.mxu0 0.0
    %616 = vmatprep.subr.mxu0 0.0
    %617 = vmatpush1.xpose.msra.mxu0 0.0
    %618 = vmatprep.subr.mxu0 0.0
    %619 = vmatpush1.xpose.msra.mxu0 0.0
    %620 = vmatprep.subr.mxu0 0.0
    %621 = vmatpush1.xpose.msra.mxu0 0.0
    %622 = vmatprep.subr.mxu0 0.0
    %623 = vmatpush1.xpose.msra.mxu0 0.0
    %624 = vmatprep.subr.mxu0 0.0
    %625 = vmatpush1.xpose.msra.mxu0 0.0
    %626 = vmatprep.subr.mxu0 0.0
    %627 = vmatpush1.xpose.msra.mxu0 0.0
    %628 = vmatprep.subr.mxu0 0.0
    %629 = vmatpush1.xpose.msra.mxu0 0.0
    %630 = vmatprep.subr.mxu0 0.0
    %631 = vmatpush1.xpose.msra.mxu0 0.0
    %632 = vmatprep.subr.mxu0 0.0
    %633 = vmatpush1.xpose.msra.mxu0 0.0
    %634 = vmatprep.subr.mxu0 0.0
    %635 = vmatpush1.xpose.msra.mxu0 0.0
    %636 = vmatprep.subr.mxu0 0.0
    %637 = vmatpush1.xpose.msra.mxu0 0.0
    %638 = vmatprep.subr.mxu0 0.0
    %639 = vmatpush1.xpose.msra.mxu0 0.0
    %640 = vmatprep.subr.mxu0 0.0
    %641 = vmatpush1.xpose.msra.mxu0 0.0
    %642 = vmatprep.subr.mxu0 0.0
    %643 = vmatpush1.xpose.msra.mxu0 0.0
    %644 = vmatprep.subr.mxu0 0.0
    %645 = vmatpush1.xpose.msra.mxu0 0.0
    %646 = vmatprep.mubr.f32.mxu0 0.0
    %647 = vmatmul.mubr.f32.gmra.mrb[0].mxu0 %v578
    %v648 = vpop.f32.mrb[0].mxu0
    %v649 = vadd.f32 %v164, %v648
    %v650 = vpop.f32.mrb[0].mxu0
    %651 = vdwg.mxu0
    %v652 = vsel %vm168, %v571, -inf
    %653 = vmax.xlane.f32.xlu0 %v652
    %v654 = vpop.xlane.xlu0 %653
    %v655 = vsel %vm168, %v649, -inf
    %656 = vmax.xlane.f32.xlu0 %v655
    %v657 = vpop.xlane.xlu0 %656
    %v658 = vsub.f32 %v571, %v654
    %v659 = vsub.f32 %v649, %v657
    %v660 = vmul.f32 %v658, 1.442695
    %v661 = vpow.pop %v660
    %v662 = vmul.f32 %v659, 1.442695
    %v663 = vpow.pop %v662
    %v664 = vsel %vm168, %v661, 0.0
    %665 = vadd.xlane.f32.xlu0 %v664
    %v666 = vpop.xlane.xlu0 %665
    %v667 = vsel %vm168, %v663, 0.0
    %668 = vadd.xlane.f32.xlu0 %v667
    %v669 = vpop.xlane.xlu0 %668
    %v670 = vrcp.pop %v666
    %v671 = vrcp.pop %v669
    %v672 = vmul.f32 %v661, %v670
    %v673 = vmul.f32 %v663, %v671
    %674 = vrot.lane.b32.xlu0 %v149, 56
    %v675 = vpop.permute.xlu0 %674
    %v678 = vsel %vm168, %v672, 0
    %680 = vmatprep.subr.mxu0 0.0
    %681 = vmatpush1.msra.mxu0 %v675
    %682 = vmatprep.subr.mxu0 0.0
    %683 = vmatpush1.msra.mxu0 0.0
    %684 = vmatprep.subr.mxu0 0.0
    %685 = vmatpush1.msra.mxu0 0.0
    %686 = vmatprep.subr.mxu0 0.0
    %687 = vmatpush1.msra.mxu0 0.0
    %688 = vmatprep.subr.mxu0 0.0
    %689 = vmatpush1.msra.mxu0 0.0
    %690 = vmatprep.subr.mxu0 0.0
    %691 = vmatpush1.msra.mxu0 0.0
    %692 = vmatprep.subr.mxu0 0.0
    %693 = vmatpush1.msra.mxu0 0.0
    %694 = vmatprep.subr.mxu0 0.0
    %695 = vmatpush1.msra.mxu0 0.0
    %696 = vmatprep.subr.mxu0 0.0
    %697 = vmatpush1.msra.mxu0 0.0
    %698 = vmatprep.subr.mxu0 0.0
    %699 = vmatpush1.msra.mxu0 0.0
    %700 = vmatprep.subr.mxu0 0.0
    %701 = vmatpush1.msra.mxu0 0.0
    %702 = vmatprep.subr.mxu0 0.0
    %703 = vmatpush1.msra.mxu0 0.0
    %704 = vmatprep.subr.mxu0 0.0
    %705 = vmatpush1.msra.mxu0 0.0
    %706 = vmatprep.subr.mxu0 0.0
    %707 = vmatpush1.msra.mxu0 0.0
    %708 = vmatprep.subr.mxu0 0.0
    %709 = vmatpush1.msra.mxu0 0.0
    %710 = vmatprep.subr.mxu0 0.0
    %711 = vmatpush1.msra.mxu0 0.0
    %712 = vmatprep.subr.mxu0 0.0
    %713 = vmatpush1.msra.mxu0 0.0
    %714 = vmatprep.subr.mxu0 0.0
    %715 = vmatpush1.msra.mxu0 0.0
    %716 = vmatprep.subr.mxu0 0.0
    %717 = vmatpush1.msra.mxu0 0.0
    %718 = vmatprep.subr.mxu0 0.0
    %719 = vmatpush1.msra.mxu0 0.0
    %720 = vmatprep.subr.mxu0 0.0
    %721 = vmatpush1.msra.mxu0 0.0
    %722 = vmatprep.subr.mxu0 0.0
    %723 = vmatpush1.msra.mxu0 0.0
    %724 = vmatprep.subr.mxu0 0.0
    %725 = vmatpush1.msra.mxu0 0.0
    %726 = vmatprep.subr.mxu0 0.0
    %727 = vmatpush1.msra.mxu0 0.0
    %728 = vmatprep.subr.mxu0 0.0
    %729 = vmatpush1.msra.mxu0 0.0
    %730 = vmatprep.subr.mxu0 0.0
    %731 = vmatpush1.msra.mxu0 0.0
    %732 = vmatprep.subr.mxu0 0.0
    %733 = vmatpush1.msra.mxu0 0.0
    %734 = vmatprep.subr.mxu0 0.0
    %735 = vmatpush1.msra.mxu0 0.0
    %736 = vmatprep.subr.mxu0 0.0
    %737 = vmatpush1.msra.mxu0 0.0
    %738 = vmatprep.subr.mxu0 0.0
    %739 = vmatpush1.msra.mxu0 0.0
    %740 = vmatprep.subr.mxu0 0.0
    %741 = vmatpush1.msra.mxu0 0.0
    %742 = vmatprep.subr.mxu0 0.0
    %743 = vmatpush1.msra.mxu0 0.0
    %744 = vmatprep.mubr.f32.mxu0 0.0
    %745 = vmatmul.mubr.f32.gmra.mrb[0].mxu0 %v678
    %v746 = vpop.f32.mrb[0].mxu0
    %v747 = vadd.f32 0.0, %v746
    %v748 = vpop.f32.mrb[0].mxu0
    %749 = vdwg.mxu0
    %750 = vrot.lane.b32.xlu0 %v154, 56
    %v751 = vpop.permute.xlu0 %750
    %v754 = vsel %vm168, %v673, 0
    %756 = vmatprep.subr.mxu0 0.0
    %757 = vmatpush1.msra.mxu0 %v751
    %758 = vmatprep.subr.mxu0 0.0
    %759 = vmatpush1.msra.mxu0 0.0
    %760 = vmatprep.subr.mxu0 0.0
    %761 = vmatpush1.msra.mxu0 0.0
    %762 = vmatprep.subr.mxu0 0.0
    %763 = vmatpush1.msra.mxu0 0.0
    %764 = vmatprep.subr.mxu0 0.0
    %765 = vmatpush1.msra.mxu0 0.0
    %766 = vmatprep.subr.mxu0 0.0
    %767 = vmatpush1.msra.mxu0 0.0
    %768 = vmatprep.subr.mxu0 0.0
    %769 = vmatpush1.msra.mxu0 0.0
    %770 = vmatprep.subr.mxu0 0.0
    %771 = vmatpush1.msra.mxu0 0.0
    %772 = vmatprep.subr.mxu0 0.0
    %773 = vmatpush1.msra.mxu0 0.0
    %774 = vmatprep.subr.mxu0 0.0
    %775 = vmatpush1.msra.mxu0 0.0
    %776 = vmatprep.subr.mxu0 0.0
    %777 = vmatpush1.msra.mxu0 0.0
    %778 = vmatprep.subr.mxu0 0.0
    %779 = vmatpush1.msra.mxu0 0.0
    %780 = vmatprep.subr.mxu0 0.0
    %781 = vmatpush1.msra.mxu0 0.0
    %782 = vmatprep.subr.mxu0 0.0
    %783 = vmatpush1.msra.mxu0 0.0
    %784 = vmatprep.subr.mxu0 0.0
    %785 = vmatpush1.msra.mxu0 0.0
    %786 = vmatprep.subr.mxu0 0.0
    %787 = vmatpush1.msra.mxu0 0.0
    %788 = vmatprep.subr.mxu0 0.0
    %789 = vmatpush1.msra.mxu0 0.0
    %790 = vmatprep.subr.mxu0 0.0
    %791 = vmatpush1.msra.mxu0 0.0
    %792 = vmatprep.subr.mxu0 0.0
    %793 = vmatpush1.msra.mxu0 0.0
    %794 = vmatprep.subr.mxu0 0.0
    %795 = vmatpush1.msra.mxu0 0.0
    %796 = vmatprep.subr.mxu0 0.0
    %797 = vmatpush1.msra.mxu0 0.0
    %798 = vmatprep.subr.mxu0 0.0
    %799 = vmatpush1.msra.mxu0 0.0
    %800 = vmatprep.subr.mxu0 0.0
    %801 = vmatpush1.msra.mxu0 0.0
    %802 = vmatprep.subr.mxu0 0.0
    %803 = vmatpush1.msra.mxu0 0.0
    %804 = vmatprep.subr.mxu0 0.0
    %805 = vmatpush1.msra.mxu0 0.0
    %806 = vmatprep.subr.mxu0 0.0
    %807 = vmatpush1.msra.mxu0 0.0
    %808 = vmatprep.subr.mxu0 0.0
    %809 = vmatpush1.msra.mxu0 0.0
    %810 = vmatprep.subr.mxu0 0.0
    %811 = vmatpush1.msra.mxu0 0.0
    %812 = vmatprep.subr.mxu0 0.0
    %813 = vmatpush1.msra.mxu0 0.0
    %814 = vmatprep.subr.mxu0 0.0
    %815 = vmatpush1.msra.mxu0 0.0
    %816 = vmatprep.subr.mxu0 0.0
    %817 = vmatpush1.msra.mxu0 0.0
    %818 = vmatprep.subr.mxu0 0.0
    %819 = vmatpush1.msra.mxu0 0.0
    %820 = vmatprep.mubr.f32.mxu0 0.0
    %821 = vmatmul.mubr.f32.gmra.mrb[0].mxu0 %v754
    %v822 = vpop.f32.mrb[0].mxu0
    %v823 = vadd.f32 0.0, %v822
    %v824 = vpop.f32.mrb[0].mxu0
    %825 = vdwg.mxu0
    %826 = vrot.lane.b32.xlu0 %v157, 112
    %v827 = vpop.permute.xlu0 %826
    %828 = vrot.lane.b32.xlu0 %v149, 80
    %v829 = vpop.permute.xlu0 %828
    %v830 = vsel %vm168, %v827, 0
    %v832 = vsel %vm168, %v829, 0
    %834 = vmatprep.subr.mxu0 0.0
    %835 = vmatpush1.xpose.msra.mxu0 %v832
    %836 = vmatprep.subr.mxu0 0.0
    %837 = vmatpush1.xpose.msra.mxu0 0.0
    %838 = vmatprep.subr.mxu0 0.0
    %839 = vmatpush1.xpose.msra.mxu0 0.0
    %840 = vmatprep.subr.mxu0 0.0
    %841 = vmatpush1.xpose.msra.mxu0 0.0
    %842 = vmatprep.subr.mxu0 0.0
    %843 = vmatpush1.xpose.msra.mxu0 0.0
    %844 = vmatprep.subr.mxu0 0.0
    %845 = vmatpush1.xpose.msra.mxu0 0.0
    %846 = vmatprep.subr.mxu0 0.0
    %847 = vmatpush1.xpose.msra.mxu0 0.0
    %848 = vmatprep.subr.mxu0 0.0
    %849 = vmatpush1.xpose.msra.mxu0 0.0
    %850 = vmatprep.subr.mxu0 0.0
    %851 = vmatpush1.xpose.msra.mxu0 0.0
    %852 = vmatprep.subr.mxu0 0.0
    %853 = vmatpush1.xpose.msra.mxu0 0.0
    %854 = vmatprep.subr.mxu0 0.0
    %855 = vmatpush1.xpose.msra.mxu0 0.0
    %856 = vmatprep.subr.mxu0 0.0
    %857 = vmatpush1.xpose.msra.mxu0 0.0
    %858 = vmatprep.subr.mxu0 0.0
    %859 = vmatpush1.xpose.msra.mxu0 0.0
    %860 = vmatprep.subr.mxu0 0.0
    %861 = vmatpush1.xpose.msra.mxu0 0.0
    %862 = vmatprep.subr.mxu0 0.0
    %863 = vmatpush1.xpose.msra.mxu0 0.0
    %864 = vmatprep.subr.mxu0 0.0
    %865 = vmatpush1.xpose.msra.mxu0 0.0
    %866 = vmatprep.subr.mxu0 0.0
    %867 = vmatpush1.xpose.msra.mxu0 0.0
    %868 = vmatprep.subr.mxu0 0.0
    %869 = vmatpush1.xpose.msra.mxu0 0.0
    %870 = vmatprep.subr.mxu0 0.0
    %871 = vmatpush1.xpose.msra.mxu0 0.0
    %872 = vmatprep.subr.mxu0 0.0
    %873 = vmatpush1.xpose.msra.mxu0 0.0
    %874 = vmatprep.subr.mxu0 0.0
    %875 = vmatpush1.xpose.msra.mxu0 0.0
    %876 = vmatprep.subr.mxu0 0.0
    %877 = vmatpush1.xpose.msra.mxu0 0.0
    %878 = vmatprep.subr.mxu0 0.0
    %879 = vmatpush1.xpose.msra.mxu0 0.0
    %880 = vmatprep.subr.mxu0 0.0
    %881 = vmatpush1.xpose.msra.mxu0 0.0
    %882 = vmatprep.subr.mxu0 0.0
    %883 = vmatpush1.xpose.msra.mxu0 0.0
    %884 = vmatprep.subr.mxu0 0.0
    %885 = vmatpush1.xpose.msra.mxu0 0.0
    %886 = vmatprep.subr.mxu0 0.0
    %887 = vmatpush1.xpose.msra.mxu0 0.0
    %888 = vmatprep.subr.mxu0 0.0
    %889 = vmatpush1.xpose.msra.mxu0 0.0
    %890 = vmatprep.subr.mxu0 0.0
    %891 = vmatpush1.xpose.msra.mxu0 0.0
    %892 = vmatprep.subr.mxu0 0.0
    %893 = vmatpush1.xpose.msra.mxu0 0.0
    %894 = vmatprep.subr.mxu0 0.0
    %895 = vmatpush1.xpose.msra.mxu0 0.0
    %896 = vmatprep.subr.mxu0 0.0
    %897 = vmatpush1.xpose.msra.mxu0 0.0
    %898 = vmatprep.mubr.f32.mxu0 0.0
    %899 = vmatmul.mubr.f32.gmra.mrb[0].mxu0 %v830
    %v900 = vpop.f32.mrb[0].mxu0
    %v901 = vadd.f32 %v164, %v900
    %v902 = vpop.f32.mrb[0].mxu0
    %903 = vdwg.mxu0
    %904 = vrot.lane.b32.xlu0 %v158, 112
    %v905 = vpop.permute.xlu0 %904
    %906 = vrot.lane.b32.xlu0 %v154, 80
    %v907 = vpop.permute.xlu0 %906
    %v908 = vsel %vm168, %v905, 0
    %v910 = vsel %vm168, %v907, 0
    %912 = vmatprep.subr.mxu0 0.0
    %913 = vmatpush1.xpose.msra.mxu0 %v910
    %914 = vmatprep.subr.mxu0 0.0
    %915 = vmatpush1.xpose.msra.mxu0 0.0
    %916 = vmatprep.subr.mxu0 0.0
    %917 = vmatpush1.xpose.msra.mxu0 0.0
    %918 = vmatprep.subr.mxu0 0.0
    %919 = vmatpush1.xpose.msra.mxu0 0.0
    %920 = vmatprep.subr.mxu0 0.0
    %921 = vmatpush1.xpose.msra.mxu0 0.0
    %922 = vmatprep.subr.mxu0 0.0
    %923 = vmatpush1.xpose.msra.mxu0 0.0
    %924 = vmatprep.subr.mxu0 0.0
    %925 = vmatpush1.xpose.msra.mxu0 0.0
    %926 = vmatprep.subr.mxu0 0.0
    %927 = vmatpush1.xpose.msra.mxu0 0.0
    %928 = vmatprep.subr.mxu0 0.0
    %929 = vmatpush1.xpose.msra.mxu0 0.0
    %930 = vmatprep.subr.mxu0 0.0
    %931 = vmatpush1.xpose.msra.mxu0 0.0
    %932 = vmatprep.subr.mxu0 0.0
    %933 = vmatpush1.xpose.msra.mxu0 0.0
    %934 = vmatprep.subr.mxu0 0.0
    %935 = vmatpush1.xpose.msra.mxu0 0.0
    %936 = vmatprep.subr.mxu0 0.0
    %937 = vmatpush1.xpose.msra.mxu0 0.0
    %938 = vmatprep.subr.mxu0 0.0
    %939 = vmatpush1.xpose.msra.mxu0 0.0
    %940 = vmatprep.subr.mxu0 0.0
    %941 = vmatpush1.xpose.msra.mxu0 0.0
    %942 = vmatprep.subr.mxu0 0.0
    %943 = vmatpush1.xpose.msra.mxu0 0.0
    %944 = vmatprep.subr.mxu0 0.0
    %945 = vmatpush1.xpose.msra.mxu0 0.0
    %946 = vmatprep.subr.mxu0 0.0
    %947 = vmatpush1.xpose.msra.mxu0 0.0
    %948 = vmatprep.subr.mxu0 0.0
    %949 = vmatpush1.xpose.msra.mxu0 0.0
    %950 = vmatprep.subr.mxu0 0.0
    %951 = vmatpush1.xpose.msra.mxu0 0.0
    %952 = vmatprep.subr.mxu0 0.0
    %953 = vmatpush1.xpose.msra.mxu0 0.0
    %954 = vmatprep.subr.mxu0 0.0
    %955 = vmatpush1.xpose.msra.mxu0 0.0
    %956 = vmatprep.subr.mxu0 0.0
    %957 = vmatpush1.xpose.msra.mxu0 0.0
    %958 = vmatprep.subr.mxu0 0.0
    %959 = vmatpush1.xpose.msra.mxu0 0.0
    %960 = vmatprep.subr.mxu0 0.0
    %961 = vmatpush1.xpose.msra.mxu0 0.0
    %962 = vmatprep.subr.mxu0 0.0
    %963 = vmatpush1.xpose.msra.mxu0 0.0
    %964 = vmatprep.subr.mxu0 0.0
    %965 = vmatpush1.xpose.msra.mxu0 0.0
    %966 = vmatprep.subr.mxu0 0.0
    %967 = vmatpush1.xpose.msra.mxu0 0.0
    %968 = vmatprep.subr.mxu0 0.0
    %969 = vmatpush1.xpose.msra.mxu0 0.0
    %970 = vmatprep.subr.mxu0 0.0
    %971 = vmatpush1.xpose.msra.mxu0 0.0
    %972 = vmatprep.subr.mxu0 0.0
    %973 = vmatpush1.xpose.msra.mxu0 0.0
    %974 = vmatprep.subr.mxu0 0.0
    %975 = vmatpush1.xpose.msra.mxu0 0.0
    %976 = vmatprep.mubr.f32.mxu0 0.0
    %977 = vmatmul.mubr.f32.gmra.mrb[0].mxu0 %v908
    %v978 = vpop.f32.mrb[0].mxu0
    %v979 = vadd.f32 %v164, %v978
    %v980 = vpop.f32.mrb[0].mxu0
    %981 = vdwg.mxu0
    %v982 = vsel %vm168, %v901, -inf
    %983 = vmax.xlane.f32.xlu0 %v982
    %v984 = vpop.xlane.xlu0 %983
    %v985 = vsel %vm168, %v979, -inf
    %986 = vmax.xlane.f32.xlu0 %v985
    %v987 = vpop.xlane.xlu0 %986
    %v988 = vsub.f32 %v901, %v984
    %v989 = vsub.f32 %v979, %v987
    %v990 = vmul.f32 %v988, 1.442695
    %v991 = vpow.pop %v990
    %v992 = vmul.f32 %v989, 1.442695
    %v993 = vpow.pop %v992
    %v994 = vsel %vm168, %v991, 0.0
    %995 = vadd.xlane.f32.xlu0 %v994
    %v996 = vpop.xlane.xlu0 %995
    %v997 = vsel %vm168, %v993, 0.0
    %998 = vadd.xlane.f32.xlu0 %v997
    %v999 = vpop.xlane.xlu0 %998
    %v1000 = vrcp.pop %v996
    %v1001 = vrcp.pop %v999
    %v1002 = vmul.f32 %v991, %v1000
    %v1003 = vmul.f32 %v993, %v1001
    %1004 = vrot.lane.b32.xlu0 %v149, 48
    %v1005 = vpop.permute.xlu0 %1004
    %v1008 = vsel %vm168, %v1002, 0
    %1010 = vmatprep.subr.mxu0 0.0
    %1011 = vmatpush1.msra.mxu0 %v1005
    %1012 = vmatprep.subr.mxu0 0.0
    %1013 = vmatpush1.msra.mxu0 0.0
    %1014 = vmatprep.subr.mxu0 0.0
    %1015 = vmatpush1.msra.mxu0 0.0
    %1016 = vmatprep.subr.mxu0 0.0
    %1017 = vmatpush1.msra.mxu0 0.0
    %1018 = vmatprep.subr.mxu0 0.0
    %1019 = vmatpush1.msra.mxu0 0.0
    %1020 = vmatprep.subr.mxu0 0.0
    %1021 = vmatpush1.msra.mxu0 0.0
    %1022 = vmatprep.subr.mxu0 0.0
    %1023 = vmatpush1.msra.mxu0 0.0
    %1024 = vmatprep.subr.mxu0 0.0
    %1025 = vmatpush1.msra.mxu0 0.0
    %1026 = vmatprep.subr.mxu0 0.0
    %1027 = vmatpush1.msra.mxu0 0.0
    %1028 = vmatprep.subr.mxu0 0.0
    %1029 = vmatpush1.msra.mxu0 0.0
    %1030 = vmatprep.subr.mxu0 0.0
    %1031 = vmatpush1.msra.mxu0 0.0
    %1032 = vmatprep.subr.mxu0 0.0
    %1033 = vmatpush1.msra.mxu0 0.0
    %1034 = vmatprep.subr.mxu0 0.0
    %1035 = vmatpush1.msra.mxu0 0.0
    %1036 = vmatprep.subr.mxu0 0.0
    %1037 = vmatpush1.msra.mxu0 0.0
    %1038 = vmatprep.subr.mxu0 0.0
    %1039 = vmatpush1.msra.mxu0 0.0
    %1040 = vmatprep.subr.mxu0 0.0
    %1041 = vmatpush1.msra.mxu0 0.0
    %1042 = vmatprep.subr.mxu0 0.0
    %1043 = vmatpush1.msra.mxu0 0.0
    %1044 = vmatprep.subr.mxu0 0.0
    %1045 = vmatpush1.msra.mxu0 0.0
    %1046 = vmatprep.subr.mxu0 0.0
    %1047 = vmatpush1.msra.mxu0 0.0
    %1048 = vmatprep.subr.mxu0 0.0
    %1049 = vmatpush1.msra.mxu0 0.0
    %1050 = vmatprep.subr.mxu0 0.0
    %1051 = vmatpush1.msra.mxu0 0.0
    %1052 = vmatprep.subr.mxu0 0.0
    %1053 = vmatpush1.msra.mxu0 0.0
    %1054 = vmatprep.subr.mxu0 0.0
    %1055 = vmatpush1.msra.mxu0 0.0
    %1056 = vmatprep.subr.mxu0 0.0
    %1057 = vmatpush1.msra.mxu0 0.0
    %1058 = vmatprep.subr.mxu0 0.0
    %1059 = vmatpush1.msra.mxu0 0.0
    %1060 = vmatprep.subr.mxu0 0.0
    %1061 = vmatpush1.msra.mxu0 0.0
    %1062 = vmatprep.subr.mxu0 0.0
    %1063 = vmatpush1.msra.mxu0 0.0
    %1064 = vmatprep.subr.mxu0 0.0
    %1065 = vmatpush1.msra.mxu0 0.0
    %1066 = vmatprep.subr.mxu0 0.0
    %1067 = vmatpush1.msra.mxu0 0.0
    %1068 = vmatprep.subr.mxu0 0.0
    %1069 = vmatpush1.msra.mxu0 0.0
    %1070 = vmatprep.subr.mxu0 0.0
    %1071 = vmatpush1.msra.mxu0 0.0
    %1072 = vmatprep.subr.mxu0 0.0
    %1073 = vmatpush1.msra.mxu0 0.0
    %1074 = vmatprep.mubr.f32.mxu0 0.0
    %1075 = vmatmul.mubr.f32.gmra.mrb[0].mxu0 %v1008
    %v1076 = vpop.f32.mrb[0].mxu0
    %v1077 = vadd.f32 0.0, %v1076
    %v1078 = vpop.f32.mrb[0].mxu0
    %1079 = vdwg.mxu0
    %1080 = vrot.lane.b32.xlu0 %v154, 48
    %v1081 = vpop.permute.xlu0 %1080
    %v1084 = vsel %vm168, %v1003, 0
    %1086 = vmatprep.subr.mxu0 0.0
    %1087 = vmatpush1.msra.mxu0 %v1081
    %1088 = vmatprep.subr.mxu0 0.0
    %1089 = vmatpush1.msra.mxu0 0.0
    %1090 = vmatprep.subr.mxu0 0.0
    %1091 = vmatpush1.msra.mxu0 0.0
    %1092 = vmatprep.subr.mxu0 0.0
    %1093 = vmatpush1.msra.mxu0 0.0
    %1094 = vmatprep.subr.mxu0 0.0
    %1095 = vmatpush1.msra.mxu0 0.0
    %1096 = vmatprep.subr.mxu0 0.0
    %1097 = vmatpush1.msra.mxu0 0.0
    %1098 = vmatprep.subr.mxu0 0.0
    %1099 = vmatpush1.msra.mxu0 0.0
    %1100 = vmatprep.subr.mxu0 0.0
    %1101 = vmatpush1.msra.mxu0 0.0
    %1102 = vmatprep.subr.mxu0 0.0
    %1103 = vmatpush1.msra.mxu0 0.0
    %1104 = vmatprep.subr.mxu0 0.0
    %1105 = vmatpush1.msra.mxu0 0.0
    %1106 = vmatprep.subr.mxu0 0.0
    %1107 = vmatpush1.msra.mxu0 0.0
    %1108 = vmatprep.subr.mxu0 0.0
    %1109 = vmatpush1.msra.mxu0 0.0
    %1110 = vmatprep.subr.mxu0 0.0
    %1111 = vmatpush1.msra.mxu0 0.0
    %1112 = vmatprep.subr.mxu0 0.0
    %1113 = vmatpush1.msra.mxu0 0.0
    %1114 = vmatprep.subr.mxu0 0.0
    %1115 = vmatpush1.msra.mxu0 0.0
    %1116 = vmatprep.subr.mxu0 0.0
    %1117 = vmatpush1.msra.mxu0 0.0
    %1118 = vmatprep.subr.mxu0 0.0
    %1119 = vmatpush1.msra.mxu0 0.0
    %1120 = vmatprep.subr.mxu0 0.0
    %1121 = vmatpush1.msra.mxu0 0.0
    %1122 = vmatprep.subr.mxu0 0.0
    %1123 = vmatpush1.msra.mxu0 0.0
    %1124 = vmatprep.subr.mxu0 0.0
    %1125 = vmatpush1.msra.mxu0 0.0
    %1126 = vmatprep.subr.mxu0 0.0
    %1127 = vmatpush1.msra.mxu0 0.0
    %1128 = vmatprep.subr.mxu0 0.0
    %1129 = vmatpush1.msra.mxu0 0.0
    %1130 = vmatprep.subr.mxu0 0.0
    %1131 = vmatpush1.msra.mxu0 0.0
    %1132 = vmatprep.subr.mxu0 0.0
    %1133 = vmatpush1.msra.mxu0 0.0
    %1134 = vmatprep.subr.mxu0 0.0
    %1135 = vmatpush1.msra.mxu0 0.0
    %1136 = vmatprep.subr.mxu0 0.0
    %1137 = vmatpush1.msra.mxu0 0.0
    %1138 = vmatprep.subr.mxu0 0.0
    %1139 = vmatpush1.msra.mxu0 0.0
    %1140 = vmatprep.subr.mxu0 0.0
    %1141 = vmatpush1.msra.mxu0 0.0
    %1142 = vmatprep.subr.mxu0 0.0
    %1143 = vmatpush1.msra.mxu0 0.0
    %1144 = vmatprep.subr.mxu0 0.0
    %1145 = vmatpush1.msra.mxu0 0.0
    %1146 = vmatprep.subr.mxu0 0.0
    %1147 = vmatpush1.msra.mxu0 0.0
    %1148 = vmatprep.subr.mxu0 0.0
    %1149 = vmatpush1.msra.mxu0 0.0
    %1150 = vmatprep.mubr.f32.mxu0 0.0
    %1151 = vmatmul.mubr.f32.gmra.mrb[0].mxu0 %v1084
    %v1152 = vpop.f32.mrb[0].mxu0
    %v1153 = vadd.f32 0.0, %v1152
    %v1154 = vpop.f32.mrb[0].mxu0
    %1155 = vdwg.mxu0
    %1156 = vrot.lane.b32.xlu0 %v157, 104
    %v1157 = vpop.permute.xlu0 %1156
    %1158 = vrot.lane.b32.xlu0 %v149, 72
    %v1159 = vpop.permute.xlu0 %1158
    %v1160 = vsel %vm168, %v1157, 0
    %v1162 = vsel %vm168, %v1159, 0
    %1164 = vmatprep.subr.mxu0 0.0
    %1165 = vmatpush1.xpose.msra.mxu0 %v1162
    %1166 = vmatprep.subr.mxu0 0.0
    %1167 = vmatpush1.xpose.msra.mxu0 0.0
    %1168 = vmatprep.subr.mxu0 0.0
    %1169 = vmatpush1.xpose.msra.mxu0 0.0
    %1170 = vmatprep.subr.mxu0 0.0
    %1171 = vmatpush1.xpose.msra.mxu0 0.0
    %1172 = vmatprep.subr.mxu0 0.0
    %1173 = vmatpush1.xpose.msra.mxu0 0.0
    %1174 = vmatprep.subr.mxu0 0.0
    %1175 = vmatpush1.xpose.msra.mxu0 0.0
    %1176 = vmatprep.subr.mxu0 0.0
    %1177 = vmatpush1.xpose.msra.mxu0 0.0
    %1178 = vmatprep.subr.mxu0 0.0
    %1179 = vmatpush1.xpose.msra.mxu0 0.0
    %1180 = vmatprep.subr.mxu0 0.0
    %1181 = vmatpush1.xpose.msra.mxu0 0.0
    %1182 = vmatprep.subr.mxu0 0.0
    %1183 = vmatpush1.xpose.msra.mxu0 0.0
    %1184 = vmatprep.subr.mxu0 0.0
    %1185 = vmatpush1.xpose.msra.mxu0 0.0
    %1186 = vmatprep.subr.mxu0 0.0
    %1187 = vmatpush1.xpose.msra.mxu0 0.0
    %1188 = vmatprep.subr.mxu0 0.0
    %1189 = vmatpush1.xpose.msra.mxu0 0.0
    %1190 = vmatprep.subr.mxu0 0.0
    %1191 = vmatpush1.xpose.msra.mxu0 0.0
    %1192 = vmatprep.subr.mxu0 0.0
    %1193 = vmatpush1.xpose.msra.mxu0 0.0
    %1194 = vmatprep.subr.mxu0 0.0
    %1195 = vmatpush1.xpose.msra.mxu0 0.0
    %1196 = vmatprep.subr.mxu0 0.0
    %1197 = vmatpush1.xpose.msra.mxu0 0.0
    %1198 = vmatprep.subr.mxu0 0.0
    %1199 = vmatpush1.xpose.msra.mxu0 0.0
    %1200 = vmatprep.subr.mxu0 0.0
    %1201 = vmatpush1.xpose.msra.mxu0 0.0
    %1202 = vmatprep.subr.mxu0 0.0
    %1203 = vmatpush1.xpose.msra.mxu0 0.0
    %1204 = vmatprep.subr.mxu0 0.0
    %1205 = vmatpush1.xpose.msra.mxu0 0.0
    %1206 = vmatprep.subr.mxu0 0.0
    %1207 = vmatpush1.xpose.msra.mxu0 0.0
    %1208 = vmatprep.subr.mxu0 0.0
    %1209 = vmatpush1.xpose.msra.mxu0 0.0
    %1210 = vmatprep.subr.mxu0 0.0
    %1211 = vmatpush1.xpose.msra.mxu0 0.0
    %1212 = vmatprep.subr.mxu0 0.0
    %1213 = vmatpush1.xpose.msra.mxu0 0.0
    %1214 = vmatprep.subr.mxu0 0.0
    %1215 = vmatpush1.xpose.msra.mxu0 0.0
    %1216 = vmatprep.subr.mxu0 0.0
    %1217 = vmatpush1.xpose.msra.mxu0 0.0
    %1218 = vmatprep.subr.mxu0 0.0
    %1219 = vmatpush1.xpose.msra.mxu0 0.0
    %1220 = vmatprep.subr.mxu0 0.0
    %1221 = vmatpush1.xpose.msra.mxu0 0.0
    %1222 = vmatprep.subr.mxu0 0.0
    %1223 = vmatpush1.xpose.msra.mxu0 0.0
    %1224 = vmatprep.subr.mxu0 0.0
    %1225 = vmatpush1.xpose.msra.mxu0 0.0
    %1226 = vmatprep.subr.mxu0 0.0
    %1227 = vmatpush1.xpose.msra.mxu0 0.0
    %1228 = vmatprep.mubr.f32.mxu0 0.0
    %1229 = vmatmul.mubr.f32.gmra.mrb[0].mxu0 %v1160
    %v1230 = vpop.f32.mrb[0].mxu0
    %v1231 = vadd.f32 %v164, %v1230
    %v1232 = vpop.f32.mrb[0].mxu0
    %1233 = vdwg.mxu0
    %1234 = vrot.lane.b32.xlu0 %v158, 104
    %v1235 = vpop.permute.xlu0 %1234
    %1236 = vrot.lane.b32.xlu0 %v154, 72
    %v1237 = vpop.permute.xlu0 %1236
    %v1238 = vsel %vm168, %v1235, 0
    %v1240 = vsel %vm168, %v1237, 0
    %1242 = vmatprep.subr.mxu0 0.0
    %1243 = vmatpush1.xpose.msra.mxu0 %v1240
    %1244 = vmatprep.subr.mxu0 0.0
    %1245 = vmatpush1.xpose.msra.mxu0 0.0
    %1246 = vmatprep.subr.mxu0 0.0
    %1247 = vmatpush1.xpose.msra.mxu0 0.0
    %1248 = vmatprep.subr.mxu0 0.0
    %1249 = vmatpush1.xpose.msra.mxu0 0.0
    %1250 = vmatprep.subr.mxu0 0.0
    %1251 = vmatpush1.xpose.msra.mxu0 0.0
    %1252 = vmatprep.subr.mxu0 0.0
    %1253 = vmatpush1.xpose.msra.mxu0 0.0
    %1254 = vmatprep.subr.mxu0 0.0
    %1255 = vmatpush1.xpose.msra.mxu0 0.0
    %1256 = vmatprep.subr.mxu0 0.0
    %1257 = vmatpush1.xpose.msra.mxu0 0.0
    %1258 = vmatprep.subr.mxu0 0.0
    %1259 = vmatpush1.xpose.msra.mxu0 0.0
    %1260 = vmatprep.subr.mxu0 0.0
    %1261 = vmatpush1.xpose.msra.mxu0 0.0
    %1262 = vmatprep.subr.mxu0 0.0
    %1263 = vmatpush1.xpose.msra.mxu0 0.0
    %1264 = vmatprep.subr.mxu0 0.0
    %1265 = vmatpush1.xpose.msra.mxu0 0.0
    %1266 = vmatprep.subr.mxu0 0.0
    %1267 = vmatpush1.xpose.msra.mxu0 0.0
    %1268 = vmatprep.subr.mxu0 0.0
    %1269 = vmatpush1.xpose.msra.mxu0 0.0
    %1270 = vmatprep.subr.mxu0 0.0
    %1271 = vmatpush1.xpose.msra.mxu0 0.0
    %1272 = vmatprep.subr.mxu0 0.0
    %1273 = vmatpush1.xpose.msra.mxu0 0.0
    %1274 = vmatprep.subr.mxu0 0.0
    %1275 = vmatpush1.xpose.msra.mxu0 0.0
    %1276 = vmatprep.subr.mxu0 0.0
    %1277 = vmatpush1.xpose.msra.mxu0 0.0
    %1278 = vmatprep.subr.mxu0 0.0
    %1279 = vmatpush1.xpose.msra.mxu0 0.0
    %1280 = vmatprep.subr.mxu0 0.0
    %1281 = vmatpush1.xpose.msra.mxu0 0.0
    %1282 = vmatprep.subr.mxu0 0.0
    %1283 = vmatpush1.xpose.msra.mxu0 0.0
    %1284 = vmatprep.subr.mxu0 0.0
    %1285 = vmatpush1.xpose.msra.mxu0 0.0
    %1286 = vmatprep.subr.mxu0 0.0
    %1287 = vmatpush1.xpose.msra.mxu0 0.0
    %1288 = vmatprep.subr.mxu0 0.0
    %1289 = vmatpush1.xpose.msra.mxu0 0.0
    %1290 = vmatprep.subr.mxu0 0.0
    %1291 = vmatpush1.xpose.msra.mxu0 0.0
    %1292 = vmatprep.subr.mxu0 0.0
    %1293 = vmatpush1.xpose.msra.mxu0 0.0
    %1294 = vmatprep.subr.mxu0 0.0
    %1295 = vmatpush1.xpose.msra.mxu0 0.0
    %1296 = vmatprep.subr.mxu0 0.0
    %1297 = vmatpush1.xpose.msra.mxu0 0.0
    %1298 = vmatprep.subr.mxu0 0.0
    %1299 = vmatpush1.xpose.msra.mxu0 0.0
    %1300 = vmatprep.subr.mxu0 0.0
    %1301 = vmatpush1.xpose.msra.mxu0 0.0
    %1302 = vmatprep.subr.mxu0 0.0
    %1303 = vmatpush1.xpose.msra.mxu0 0.0
    %1304 = vmatprep.subr.mxu0 0.0
    %1305 = vmatpush1.xpose.msra.mxu0 0.0
    %1306 = vmatprep.mubr.f32.mxu0 0.0
    %1307 = vmatmul.mubr.f32.gmra.mrb[0].mxu0 %v1238
    %v1308 = vpop.f32.mrb[0].mxu0
    %v1309 = vadd.f32 %v164, %v1308
    %v1310 = vpop.f32.mrb[0].mxu0
    %1311 = vdwg.mxu0
    %v1312 = vsel %vm168, %v1231, -inf
    %1313 = vmax.xlane.f32.xlu0 %v1312
    %v1314 = vpop.xlane.xlu0 %1313
    %v1315 = vsel %vm168, %v1309, -inf
    %1316 = vmax.xlane.f32.xlu0 %v1315
    %v1317 = vpop.xlane.xlu0 %1316
    %v1318 = vsub.f32 %v1231, %v1314
    %v1319 = vsub.f32 %v1309, %v1317
    %v1320 = vmul.f32 %v1318, 1.442695
    %v1321 = vpow.pop %v1320
    %v1322 = vmul.f32 %v1319, 1.442695
    %v1323 = vpow.pop %v1322
    %v1324 = vsel %vm168, %v1321, 0.0
    %1325 = vadd.xlane.f32.xlu0 %v1324
    %v1326 = vpop.xlane.xlu0 %1325
    %v1327 = vsel %vm168, %v1323, 0.0
    %1328 = vadd.xlane.f32.xlu0 %v1327
    %v1329 = vpop.xlane.xlu0 %1328
    %v1330 = vrcp.pop %v1326
    %v1331 = vrcp.pop %v1329
    %v1332 = vmul.f32 %v1321, %v1330
    %v1333 = vmul.f32 %v1323, %v1331
    %1334 = vrot.lane.b32.xlu0 %v149, 40
    %v1335 = vpop.permute.xlu0 %1334
    %v1338 = vsel %vm168, %v1332, 0
    %1340 = vmatprep.subr.mxu0 0.0
    %1341 = vmatpush1.msra.mxu0 %v1335
    %1342 = vmatprep.subr.mxu0 0.0
    %1343 = vmatpush1.msra.mxu0 0.0
    %1344 = vmatprep.subr.mxu0 0.0
    %1345 = vmatpush1.msra.mxu0 0.0
    %1346 = vmatprep.subr.mxu0 0.0
    %1347 = vmatpush1.msra.mxu0 0.0
    %1348 = vmatprep.subr.mxu0 0.0
    %1349 = vmatpush1.msra.mxu0 0.0
    %1350 = vmatprep.subr.mxu0 0.0
    %1351 = vmatpush1.msra.mxu0 0.0
    %1352 = vmatprep.subr.mxu0 0.0
    %1353 = vmatpush1.msra.mxu0 0.0
    %1354 = vmatprep.subr.mxu0 0.0
    %1355 = vmatpush1.msra.mxu0 0.0
    %1356 = vmatprep.subr.mxu0 0.0
    %1357 = vmatpush1.msra.mxu0 0.0
    %1358 = vmatprep.subr.mxu0 0.0
    %1359 = vmatpush1.msra.mxu0 0.0
    %1360 = vmatprep.subr.mxu0 0.0
    %1361 = vmatpush1.msra.mxu0 0.0
    %1362 = vmatprep.subr.mxu0 0.0
    %1363 = vmatpush1.msra.mxu0 0.0
    %1364 = vmatprep.subr.mxu0 0.0
    %1365 = vmatpush1.msra.mxu0 0.0
    %1366 = vmatprep.subr.mxu0 0.0
    %1367 = vmatpush1.msra.mxu0 0.0
    %1368 = vmatprep.subr.mxu0 0.0
    %1369 = vmatpush1.msra.mxu0 0.0
    %1370 = vmatprep.subr.mxu0 0.0
    %1371 = vmatpush1.msra.mxu0 0.0
    %1372 = vmatprep.subr.mxu0 0.0
    %1373 = vmatpush1.msra.mxu0 0.0
    %1374 = vmatprep.subr.mxu0 0.0
    %1375 = vmatpush1.msra.mxu0 0.0
    %1376 = vmatprep.subr.mxu0 0.0
    %1377 = vmatpush1.msra.mxu0 0.0
    %1378 = vmatprep.subr.mxu0 0.0
    %1379 = vmatpush1.msra.mxu0 0.0
    %1380 = vmatprep.subr.mxu0 0.0
    %1381 = vmatpush1.msra.mxu0 0.0
    %1382 = vmatprep.subr.mxu0 0.0
    %1383 = vmatpush1.msra.mxu0 0.0
    %1384 = vmatprep.subr.mxu0 0.0
    %1385 = vmatpush1.msra.mxu0 0.0
    %1386 = vmatprep.subr.mxu0 0.0
    %1387 = vmatpush1.msra.mxu0 0.0
    %1388 = vmatprep.subr.mxu0 0.0
    %1389 = vmatpush1.msra.mxu0 0.0
    %1390 = vmatprep.subr.mxu0 0.0
    %1391 = vmatpush1.msra.mxu0 0.0
    %1392 = vmatprep.subr.mxu0 0.0
    %1393 = vmatpush1.msra.mxu0 0.0
    %1394 = vmatprep.subr.mxu0 0.0
    %1395 = vmatpush1.msra.mxu0 0.0
    %1396 = vmatprep.subr.mxu0 0.0
    %1397 = vmatpush1.msra.mxu0 0.0
    %1398 = vmatprep.subr.mxu0 0.0
    %1399 = vmatpush1.msra.mxu0 0.0
    %1400 = vmatprep.subr.mxu0 0.0
    %1401 = vmatpush1.msra.mxu0 0.0
    %1402 = vmatprep.subr.mxu0 0.0
    %1403 = vmatpush1.msra.mxu0 0.0
    %1404 = vmatprep.mubr.f32.mxu0 0.0
    %1405 = vmatmul.mubr.f32.gmra.mrb[0].mxu0 %v1338
    %v1406 = vpop.f32.mrb[0].mxu0
    %v1407 = vadd.f32 0.0, %v1406
    %v1408 = vpop.f32.mrb[0].mxu0
    %1409 = vdwg.mxu0
    %1410 = vrot.lane.b32.xlu0 %v154, 40
    %v1411 = vpop.permute.xlu0 %1410
    %v1414 = vsel %vm168, %v1333, 0
    %1416 = vmatprep.subr.mxu0 0.0
    %1417 = vmatpush1.msra.mxu0 %v1411
    %1418 = vmatprep.subr.mxu0 0.0
    %1419 = vmatpush1.msra.mxu0 0.0
    %1420 = vmatprep.subr.mxu0 0.0
    %1421 = vmatpush1.msra.mxu0 0.0
    %1422 = vmatprep.subr.mxu0 0.0
    %1423 = vmatpush1.msra.mxu0 0.0
    %1424 = vmatprep.subr.mxu0 0.0
    %1425 = vmatpush1.msra.mxu0 0.0
    %1426 = vmatprep.subr.mxu0 0.0
    %1427 = vmatpush1.msra.mxu0 0.0
    %1428 = vmatprep.subr.mxu0 0.0
    %1429 = vmatpush1.msra.mxu0 0.0
    %1430 = vmatprep.subr.mxu0 0.0
    %1431 = vmatpush1.msra.mxu0 0.0
    %1432 = vmatprep.subr.mxu0 0.0
    %1433 = vmatpush1.msra.mxu0 0.0
    %1434 = vmatprep.subr.mxu0 0.0
    %1435 = vmatpush1.msra.mxu0 0.0
    %1436 = vmatprep.subr.mxu0 0.0
    %1437 = vmatpush1.msra.mxu0 0.0
    %1438 = vmatprep.subr.mxu0 0.0
    %1439 = vmatpush1.msra.mxu0 0.0
    %1440 = vmatprep.subr.mxu0 0.0
    %1441 = vmatpush1.msra.mxu0 0.0
    %1442 = vmatprep.subr.mxu0 0.0
    %1443 = vmatpush1.msra.mxu0 0.0
    %1444 = vmatprep.subr.mxu0 0.0
    %1445 = vmatpush1.msra.mxu0 0.0
    %1446 = vmatprep.subr.mxu0 0.0
    %1447 = vmatpush1.msra.mxu0 0.0
    %1448 = vmatprep.subr.mxu0 0.0
    %1449 = vmatpush1.msra.mxu0 0.0
    %1450 = vmatprep.subr.mxu0 0.0
    %1451 = vmatpush1.msra.mxu0 0.0
    %1452 = vmatprep.subr.mxu0 0.0
    %1453 = vmatpush1.msra.mxu0 0.0
    %1454 = vmatprep.subr.mxu0 0.0
    %1455 = vmatpush1.msra.mxu0 0.0
    %1456 = vmatprep.subr.mxu0 0.0
    %1457 = vmatpush1.msra.mxu0 0.0
    %1458 = vmatprep.subr.mxu0 0.0
    %1459 = vmatpush1.msra.mxu0 0.0
    %1460 = vmatprep.subr.mxu0 0.0
    %1461 = vmatpush1.msra.mxu0 0.0
    %1462 = vmatprep.subr.mxu0 0.0
    %1463 = vmatpush1.msra.mxu0 0.0
    %1464 = vmatprep.subr.mxu0 0.0
    %1465 = vmatpush1.msra.mxu0 0.0
    %1466 = vmatprep.subr.mxu0 0.0
    %1467 = vmatpush1.msra.mxu0 0.0
    %1468 = vmatprep.subr.mxu0 0.0
    %1469 = vmatpush1.msra.mxu0 0.0
    %1470 = vmatprep.subr.mxu0 0.0
    %1471 = vmatpush1.msra.mxu0 0.0
    %1472 = vmatprep.subr.mxu0 0.0
    %1473 = vmatpush1.msra.mxu0 0.0
    %1474 = vmatprep.subr.mxu0 0.0
    %1475 = vmatpush1.msra.mxu0 0.0
    %1476 = vmatprep.subr.mxu0 0.0
    %1477 = vmatpush1.msra.mxu0 0.0
    %1478 = vmatprep.subr.mxu0 0.0
    %1479 = vmatpush1.msra.mxu0 0.0
    %1480 = vmatprep.mubr.f32.mxu0 0.0
    %1481 = vmatmul.mubr.f32.gmra.mrb[0].mxu0 %v1414
    %v1482 = vpop.f32.mrb[0].mxu0
    %v1483 = vadd.f32 0.0, %v1482
    %v1484 = vpop.f32.mrb[0].mxu0
    %1485 = vdwg.mxu0
    %1488 = vrot.lane.b32.xlu0 %v747, 8
    %v1489 = vpop.permute.xlu0 %1488
    %1490 = vrot.lane.b32.xlu0 %v823, 8
    %v1491 = vpop.permute.xlu0 %1490
    %1496 = vrot.lane.b32.xlu0 %v1077, 16
    %v1497 = vpop.permute.xlu0 %1496
    %1498 = vrot.lane.b32.xlu0 %v1153, 16
    %v1499 = vpop.permute.xlu0 %1498
    %1504 = vrot.lane.b32.xlu0 %v1407, 24
    %v1505 = vpop.permute.xlu0 %1504
    %1506 = vrot.lane.b32.xlu0 %v1483, 24
    %v1507 = vpop.permute.xlu0 %1506
    %v1510 = vsel %vm168, %v417, %v1489
    %v1511 = vsel %vm168, %v493, %v1491
    %vm1512 = vcmask 130048
    %v1513 = vsel %vm1512, %v1510, %v1497
    %v1514 = vsel %vm1512, %v1511, %v1499
    %vm1515 = vcmask 195584
    %v1516 = vsel %vm1515, %v1513, %v1505
    %v1517 = vsel %vm1515, %v1514, %v1507
    %v1518 = vld [vmem:[#allocation7] sm:$0xff]
    %v1519 = vld [vmem:[#allocation7 + $0x8] sm:$0xff]
    %v1520 = vld [vmem:[#allocation7 + $0x10] sm:$0xff]
    %v1521 = vld [vmem:[#allocation7 + $0x18] sm:$0xff]
    %v1522 = vld [vmem:[%s4] sm:$0x1]
    %v1524 = vlaneseq
    %v1525 = vshrl.u32 %v1524, 7
    %v1526 = vsub.s32 0, %v1525
    %v1527 = vrot.slane %v1522, %v1526
    %v1530 = vsel %vm75, %v1516, 0
    %v1533 = vsel %vm75, %v1517, 0
    %1535 = vmatprep.subr.mxu0 0.0
    %1536 = vmatpush1.msra.mxu0 %v1518
    %1537 = vmatprep.subr.mxu0 0.0
    %1538 = vmatpush1.msra.mxu0 %v1519
    %1539 = vmatprep.subr.mxu0 0.0
    %1540 = vmatpush1.msra.mxu0 %v1520
    %1541 = vmatprep.subr.mxu0 0.0
    %1542 = vmatpush1.msra.mxu0 %v1521
    %1543 = vmatprep.subr.mxu0 0.0
    %1544 = vmatpush1.msra.mxu0 0.0
    %1545 = vmatprep.subr.mxu0 0.0
    %1546 = vmatpush1.msra.mxu0 0.0
    %1547 = vmatprep.subr.mxu0 0.0
    %1548 = vmatpush1.msra.mxu0 0.0
    %1549 = vmatprep.subr.mxu0 0.0
    %1550 = vmatpush1.msra.mxu0 0.0
    %1551 = vmatprep.subr.mxu0 0.0
    %1552 = vmatpush1.msra.mxu0 0.0
    %1553 = vmatprep.subr.mxu0 0.0
    %1554 = vmatpush1.msra.mxu0 0.0
    %1555 = vmatprep.subr.mxu0 0.0
    %1556 = vmatpush1.msra.mxu0 0.0
    %1557 = vmatprep.subr.mxu0 0.0
    %1558 = vmatpush1.msra.mxu0 0.0
    %1559 = vmatprep.subr.mxu0 0.0
    %1560 = vmatpush1.msra.mxu0 0.0
    %1561 = vmatprep.subr.mxu0 0.0
    %1562 = vmatpush1.msra.mxu0 0.0
    %1563 = vmatprep.subr.mxu0 0.0
    %1564 = vmatpush1.msra.mxu0 0.0
    %1565 = vmatprep.subr.mxu0 0.0
    %1566 = vmatpush1.msra.mxu0 0.0
    %1567 = vmatprep.subr.mxu0 0.0
    %1568 = vmatpush1.msra.mxu0 0.0
    %1569 = vmatprep.subr.mxu0 0.0
    %1570 = vmatpush1.msra.mxu0 0.0
    %1571 = vmatprep.subr.mxu0 0.0
    %1572 = vmatpush1.msra.mxu0 0.0
    %1573 = vmatprep.subr.mxu0 0.0
    %1574 = vmatpush1.msra.mxu0 0.0
    %1575 = vmatprep.subr.mxu0 0.0
    %1576 = vmatpush1.msra.mxu0 0.0
    %1577 = vmatprep.subr.mxu0 0.0
    %1578 = vmatpush1.msra.mxu0 0.0
    %1579 = vmatprep.subr.mxu0 0.0
    %1580 = vmatpush1.msra.mxu0 0.0
    %1581 = vmatprep.subr.mxu0 0.0
    %1582 = vmatpush1.msra.mxu0 0.0
    %1583 = vmatprep.subr.mxu0 0.0
    %1584 = vmatpush1.msra.mxu0 0.0
    %1585 = vmatprep.subr.mxu0 0.0
    %1586 = vmatpush1.msra.mxu0 0.0
    %1587 = vmatprep.subr.mxu0 0.0
    %1588 = vmatpush1.msra.mxu0 0.0
    %1589 = vmatprep.subr.mxu0 0.0
    %1590 = vmatpush1.msra.mxu0 0.0
    %1591 = vmatprep.subr.mxu0 0.0
    %1592 = vmatpush1.msra.mxu0 0.0
    %1593 = vmatprep.subr.mxu0 0.0
    %1594 = vmatpush1.msra.mxu0 0.0
    %1595 = vmatprep.subr.mxu0 0.0
    %1596 = vmatpush1.msra.mxu0 0.0
    %1597 = vmatprep.subr.mxu0 0.0
    %1598 = vmatpush1.msra.mxu0 0.0
    %1599 = vmatprep.mubr.f32.mxu0 0.0
    %1600 = vmatmul.mubr.f32.gmra.mrb[0].mxu0 %v1530
    %v1601 = vpop.f32.mrb[0].mxu0
    %v1602 = vadd.f32 %v1527, %v1601
    %v1603 = vpop.f32.mrb[0].mxu0
    %1604 = vmatprep.mubr.f32.mxu0 0.0
    %1605 = vmatmul.mubr.f32.gmra.mrb[0].mxu0 %v1533
    %v1606 = vpop.f32.mrb[0].mxu0
    %v1607 = vadd.f32 %v1527, %v1606
    %v1608 = vpop.f32.mrb[0].mxu0
    %1609 = vdwg.mxu0
    %1610 = vst.msk [vmem:[#allocation8] sm:$0xff] %vm75, %v1602
    %1611 = vst.msk [vmem:[#allocation8 + $0x8] sm:$0xff] %vm75, %v1607
    // Predicated region
    $region34: #{tpu_custom_call.1} parent=1 // pred_check
      _
    $region35: #{tpu_custom_call.1} parent=1 // pred_check_branch
      %1613 = sbr.rel (0) target = $region37
    $region36: #{tpu_custom_call.1} parent=1 // pred_region
      %s1615 = ssub.s32 256, 256
      %1616 = vsyncadd [#allocation4], %s1615
      %s1617 = sshll.u32 [#allocation8], 4
      %s1618 = int_to_ptr.vmem [resolvable:$true] %s1617
      %1623 = dma.vmem_to_hbm [thread:$0]  %s1618, 256, %s5, [#allocation4], 128, 128, 8
    $region37: #{tpu_custom_call.1} parent=1 // pred_fallthru
      _
    // Predicated region
    $region38: #{tpu_custom_call.1} parent=1 // pred_check
      _
    $region39: #{tpu_custom_call.1} parent=1 // pred_check_branch
      %1625 = sbr.rel (0) target = $region41
    $region40: #{tpu_custom_call.1} parent=1 // pred_region
      %1626 = dma.done [#allocation4], 256
    $region41: #{tpu_custom_call.1} parent=1 // pred_fallthru
      _
    %1627 = vsyncpa [#allocation3], 1
    %1628 = vsyncpa [#allocation6], 1
    %1629 = vsyncpa [#allocation4], 1

</llo_original>
